<compile_context>
chip_gen: v5e
topology: v5e:2x2
jax: 0.10.0
libtpu: 0.0.40
codegen_flags: <defaults>
</compile_context>

<pallas_src>
import functools
import math

import jax
import jax.numpy as jnp
from jax.experimental import pallas as pl
from jax.experimental.pallas import tpu as pltpu

EPS = 1e-5  # torch.nn.InstanceNorm2d default


# ----------------------------------------------------------------------------
# Pallas kernel: fused reflection-padded 3x3 conv + bias + InstanceNorm(affine)
#                + optional ReLU + optional fused residual add
# ----------------------------------------------------------------------------
def _conv3x3_in_kernel(xpad_ref, w_ref, b_ref, g_ref, bt_ref, *rest,
                       relu, add_skip, H, W, TH, CI, CO):
    """One row-tile of one sample.

    xpad_ref : (1, H+2, W+2, CI) bf16  padded input, resident per sample
    w_ref    : (9, CI, CO)       bf16  per-tap weights (tap = dy*3 + dx)
    b/g/bt   : (1, CO)           f32   bias / InstanceNorm gamma / beta
    skip_ref : (1, H, W, CO)     f32   (only when add_skip) residual input
    o_ref    : (1, H, W, CO)     f32   output, resident across the row-tile axis
    sum/ssq  : (1, CO)           f32   scratch: running per-channel sum / sumsq
    """
    if add_skip:
        skip_ref, o_ref, sum_ref, ssq_ref = rest
    else:
        o_ref, sum_ref, ssq_ref = rest

    t = pl.program_id(1)

    @pl.when(t == 0)
    def _init():
        sum_ref[...] = jnp.zeros_like(sum_ref)
        ssq_ref[...] = jnp.zeros_like(ssq_ref)

    row0 = pl.multiple_of(t * TH, TH)

    # 3x3 conv as 9 shifted matmuls on the MXU (bf16 operands, f32 accumulation).
    acc = jnp.zeros((TH * W, CO), jnp.float32)
    for dy in range(3):
        for dx in range(3):
            xs = xpad_ref[0, pl.ds(row0 + dy, TH), pl.ds(dx, W), :]   # (TH, W, CI)
            acc = acc + jnp.dot(xs.reshape(TH * W, CI), w_ref[dy * 3 + dx],
                                preferred_element_type=jnp.float32)
    acc = acc + b_ref[...]                                            # (TH*W, CO)

    # One-pass InstanceNorm statistics for this row tile.
    sum_ref[...] += jnp.sum(acc, axis=0, keepdims=True)
    ssq_ref[...] += jnp.sum(acc * acc, axis=0, keepdims=True)

    # Stash pre-norm rows into the per-sample resident output slab (stays in
    # VMEM; HBM writeback happens once after the finalize pass).
    o_ref[0, pl.ds(row0, TH), :, :] = acc.reshape(TH, W, CO)

    @pl.when(t == pl.num_programs(1) - 1)
    def _finalize():
        inv_n = 1.0 / float(H * W)
        mean = sum_ref[...] * inv_n                                   # (1, CO)
        var = jnp.maximum(ssq_ref[...] * inv_n - mean * mean, 0.0)
        scale = g_ref[...] * jax.lax.rsqrt(var + EPS)
        shift = bt_ref[...] - mean * scale
        y = o_ref[0] * scale.reshape(1, 1, CO) + shift.reshape(1, 1, CO)
        if relu:
            y = jnp.maximum(y, 0.0)
        if add_skip:
            y = y + skip_ref[0]
        o_ref[0] = y.astype(o_ref.dtype)


# ----------------------------------------------------------------------------
# Wrapper: ConvBlock(kernel=3, stride=1, normalize=True) with optional fused skip
# ----------------------------------------------------------------------------
def _round_up(x, m):
    return (x + m - 1) // m * m


def _pick_row_tile(H, W, row_budget):
    """Largest divisor of H whose tile (TH*W matmul rows) fits the row budget."""
    cap = max(1, min(H, row_budget // max(W, 1)))
    for th in range(cap, 0, -1):
        if H % th == 0:
            return th
    return H


def conv3x3_in_block(x, w, b, gamma, beta, *, relu, skip=None, row_budget=1024):
    """x: (N, H, W, Cin) f32 NHWC; w: (3, 3, Cin, Cout); b/gamma/beta: (Cout,).
    Returns (N, H, W, Cout) f32. Mirrors ConvBlock(k=3, s=1, normalize=True),
    optionally fusing `+ skip` (residual) into the epilogue."""
    N, H, W, Cin = x.shape
    Cout = w.shape[3]
    LANE = 128
    Cp = _round_up(Cin, LANE)
    Cq = _round_up(Cout, LANE)

    # Pad channels to full 128-lane tiles (padded lanes stay exactly zero:
    # zero weights/bias and zero gamma/beta -> zero outputs, sliced off below).
    if Cp != Cin:
        x = jnp.pad(x, ((0, 0), (0, 0), (0, 0), (0, Cp - Cin)))
    w_p = jnp.pad(w, ((0, 0), (0, 0), (0, Cp - Cin), (0, Cq - Cout)))
    b_p = jnp.pad(b, (0, Cq - Cout)).reshape(1, Cq).astype(jnp.float32)
    g_p = jnp.pad(gamma, (0, Cq - Cout)).reshape(1, Cq).astype(jnp.float32)
    bt_p = jnp.pad(beta, (0, Cq - Cout)).reshape(1, Cq).astype(jnp.float32)

    # ReflectionPad2d(1) host-side (≈1.1x, vs. the 9x im2col it replaces);
    # bf16 MXU operands halve DMA bytes and hit the native bf16 MXU path.
    x_pad = jnp.pad(x, ((0, 0), (1, 1), (1, 1), (0, 0)),
                    mode="reflect").astype(jnp.bfloat16)
    w_taps = w_p.reshape(9, Cp, Cq).astype(jnp.bfloat16)

    TH = _pick_row_tile(H, W, row_budget)
    grid = (N, H // TH)

    in_specs = [
        pl.BlockSpec((1, H + 2, W + 2, Cp), lambda n, t: (n, 0, 0, 0)),
        pl.BlockSpec((9, Cp, Cq), lambda n, t: (0, 0, 0)),
        pl.BlockSpec((1, Cq), lambda n, t: (0, 0)),
        pl.BlockSpec((1, Cq), lambda n, t: (0, 0)),
        pl.BlockSpec((1, Cq), lambda n, t: (0, 0)),
    ]
    inputs = [x_pad, w_taps, b_p, g_p, bt_p]
    if skip is not None:
        skip_p = skip.astype(jnp.float32)
        if Cq != Cout:
            skip_p = jnp.pad(skip_p, ((0, 0), (0, 0), (0, 0), (0, Cq - Cout)))
        in_specs.append(pl.BlockSpec((1, H, W, Cq), lambda n, t: (n, 0, 0, 0)))
        inputs.append(skip_p)

    # VMEM budget: double-buffered inputs + resident output + scratch, with slack.
    def nbytes(shape, dt):
        return math.prod(shape) * jnp.dtype(dt).itemsize

    est = 2 * (nbytes((1, H + 2, W + 2, Cp), jnp.bfloat16)
               + nbytes((9, Cp, Cq), jnp.bfloat16)
               + 3 * nbytes((1, Cq), jnp.float32)
               + (nbytes((1, H, W, Cq), jnp.float32) if skip is not None else 0))
    est += 2 * nbytes((1, H, W, Cq), jnp.float32) + 2 * nbytes((1, Cq), jnp.float32)
    vmem_limit = int(min(max(3 * est, 16 * 2**20), 64 * 2**20))

    kernel = functools.partial(_conv3x3_in_kernel, relu=relu,
                               add_skip=skip is not None,
                               H=H, W=W, TH=TH, CI=Cp, CO=Cq)

    out = pl.pallas_call(
        kernel,
        out_shape=jax.ShapeDtypeStruct((N, H, W, Cq), jnp.float32),
        grid=grid,
        in_specs=in_specs,
        out_specs=pl.BlockSpec((1, H, W, Cq), lambda n, t: (n, 0, 0, 0)),
        scratch_shapes=[pltpu.VMEM((1, Cq), jnp.float32),
                        pltpu.VMEM((1, Cq), jnp.float32)],
        compiler_params=pltpu.CompilerParams(
            dimension_semantics=("parallel", "arbitrary"),
            vmem_limit_bytes=vmem_limit),
    )(*inputs)

    return out[..., :Cout] if Cq != Cout else out


def residual_block(x, params1, params2, *, row_budget=1024):
    """PyTorch ResidualBlock forward: ConvBlock(relu) -> ConvBlock(no relu) + x."""
    w1, b1, g1, bt1 = params1
    w2, b2, g2, bt2 = params2
    y = conv3x3_in_block(x, w1, b1, g1, bt1, relu=True, row_budget=row_budget)
    # Residual add fused into the second conv's epilogue (no extra HBM round trip).
    return conv3x3_in_block(y, w2, b2, g2, bt2, relu=False, skip=x,
                            row_budget=row_budget)


# ----------------------------------------------------------------------------
# Pure-JAX f32 reference (for correctness check only)
# ----------------------------------------------------------------------------
def _conv_block_ref(x, w, b, gamma, beta, relu):
    xp = jnp.pad(x, ((0, 0), (1, 1), (1, 1), (0, 0)), mode="reflect")
    y = jax.lax.conv_general_dilated(
        xp, w, window_strides=(1, 1), padding="VALID",
        dimension_numbers=("NHWC", "HWIO", "NHWC"))
    y = y + b
    mean = jnp.mean(y, axis=(1, 2), keepdims=True)
    var = jnp.mean(jnp.square(y - mean), axis=(1, 2), keepdims=True)
    y = (y - mean) * jax.lax.rsqrt(var + EPS) * gamma + beta
    return jnp.maximum(y, 0.0) if relu else y


def residual_block_ref(x, p1, p2):
    y = _conv_block_ref(x, *p1, relu=True)
    y = _conv_block_ref(y, *p2, relu=False)
    return y + x


# ----------------------------------------------------------------------------
def init_conv_params(key, cin, cout, k=3):
    kw, kb, kg, kt = jax.random.split(key, 4)
    fan_in = cin * k * k
    w = jax.random.normal(kw, (k, k, cin, cout), jnp.float32) / math.sqrt(fan_in)
    b = 0.1 * jax.random.normal(kb, (cout,), jnp.float32)
    gamma = 1.0 + 0.1 * jax.random.normal(kg, (cout,), jnp.float32)
    beta = 0.1 * jax.random.normal(kt, (cout,), jnp.float32)
    return (w, b, gamma, beta)


if __name__ == "__main__":
    key = jax.random.PRNGKey(0)
    kx, k1, k2 = jax.random.split(key, 3)

    # PyTorch-style NCHW input; small shapes (ResidualBlock(channels=32)).
    N, C, H, W = 2, 32, 16, 16
    x_nchw = jax.random.normal(kx, (N, C, H, W), jnp.float32)
    p1 = init_conv_params(k1, C, C, 3)
    p2 = init_conv_params(k2, C, C, 3)

    x_nhwc = jnp.transpose(x_nchw, (0, 2, 3, 1))
    # row_budget=128 -> TH=8 -> 2 row tiles per sample: exercises the streamed
    # one-pass InstanceNorm stats + finalize path on this small demo shape.
    out_nhwc = residual_block(x_nhwc, p1, p2, row_budget=128)
    out_nchw = jnp.transpose(out_nhwc, (0, 3, 1, 2))
    jax.block_until_ready(out_nchw)
    assert out_nchw.shape == (N, C, H, W), out_nchw.shape

    # Correctness against the f32 reference (bf16 MXU operands -> loose tol).
    ref = residual_block_ref(x_nhwc, p1, p2)
    err = float(jnp.max(jnp.abs(out_nhwc - ref)))
    assert err < 1e-1, f"max abs error {err}"

    print("KERNEL_OK")
</pallas_src>

<mosaic_0001>
module attributes {stable_mosaic.version = 11 : i64} {
  func.func @_conv3x3_in_kernel(%arg0: i32, %arg1: i32, %arg2: memref<1x18x18x128xbf16, #tpu.memory_space<vmem>>, %arg3: memref<9x128x128xbf16, #tpu.memory_space<vmem>>, %arg4: memref<1x128xf32, #tpu.memory_space<vmem>>, %arg5: memref<1x128xf32, #tpu.memory_space<vmem>>, %arg6: memref<1x128xf32, #tpu.memory_space<vmem>>, %arg7: memref<1x16x16x128xf32, #tpu.memory_space<vmem>>, %arg8: memref<1x128xf32, #tpu.memory_space<vmem>>, %arg9: memref<1x128xf32, #tpu.memory_space<vmem>>) attributes {dimension_semantics = [#tpu.dimension_semantics<parallel>, #tpu.dimension_semantics<arbitrary>], iteration_bounds = array<i64: 2, 2>, scalar_prefetch = 0 : i64, scratch_operands = 2 : i64, tpu.core_type = #tpu.core_type<tc>, window_params = [{transform_indices = @transform_0, window_bounds = array<i64: 1, 18, 18, 128>}, {pipeline_mode = #tpu.pipeline_mode<synchronous>, transform_indices = @transform_1, window_bounds = array<i64: 9, 128, 128>}, {pipeline_mode = #tpu.pipeline_mode<synchronous>, transform_indices = @transform_2, window_bounds = array<i64: 1, 128>}, {pipeline_mode = #tpu.pipeline_mode<synchronous>, transform_indices = @transform_3, window_bounds = array<i64: 1, 128>}, {pipeline_mode = #tpu.pipeline_mode<synchronous>, transform_indices = @transform_4, window_bounds = array<i64: 1, 128>}, {transform_indices = @transform_5, window_bounds = array<i64: 1, 16, 16, 128>}]} {
    %c0_i32 = arith.constant 0 : i32
    %0 = arith.cmpi eq, %arg1, %c0_i32 : i32
    %1 = arith.extui %0 : i1 to i32
    %c0_i32_0 = arith.constant 0 : i32
    %2 = arith.cmpi ne, %1, %c0_i32_0 : i32
    scf.if %2 {
      %cst_79 = arith.constant 0.000000e+00 : f32
      %109 = vector.broadcast %cst_79 : f32 to vector<1x128xf32>
      %c0_80 = arith.constant 0 : index
      %c0_81 = arith.constant 0 : index
      %110 = vector.load %arg8[%c0_80, %c0_81] : memref<1x128xf32, #tpu.memory_space<vmem>>, vector<1x128xf32>
      tpu.vector_store %arg8[%c0_80, %c0_81], %109 {strides = array<i32>} : memref<1x128xf32, #tpu.memory_space<vmem>>, vector<1x128xf32>,
      %cst_82 = arith.constant 0.000000e+00 : f32
      %111 = vector.broadcast %cst_82 : f32 to vector<1x128xf32>
      %c0_83 = arith.constant 0 : index
      %c0_84 = arith.constant 0 : index
      %112 = vector.load %arg9[%c0_83, %c0_84] : memref<1x128xf32, #tpu.memory_space<vmem>>, vector<1x128xf32>
      tpu.vector_store %arg9[%c0_83, %c0_84], %111 {strides = array<i32>} : memref<1x128xf32, #tpu.memory_space<vmem>>, vector<1x128xf32>,
    } else {
    }
    %c8_i32 = arith.constant 8 : i32
    %3 = arith.muli %arg1, %c8_i32 : i32
    %4 = tpu.assume_multiple %3, 8 : i32
    %cst = arith.constant 0.000000e+00 : f32
    %5 = vector.broadcast %cst : f32 to vector<128x128xf32>
    %c0_i32_1 = arith.constant 0 : i32
    %6 = arith.addi %4, %c0_i32_1 : i32
    %c0 = arith.constant 0 : index
    %7 = arith.index_cast %6 : i32 to index
    %c0_2 = arith.constant 0 : index
    %c0_3 = arith.constant 0 : index
    %8 = vector.load %arg2[%c0, %7, %c0_2, %c0_3] : memref<1x18x18x128xbf16, #tpu.memory_space<vmem>>, vector<1x8x16x128xbf16>
    %9 = vector.shape_cast %8 : vector<1x8x16x128xbf16> to vector<8x16x128xbf16>
    %10 = vector.shape_cast %9 : vector<8x16x128xbf16> to vector<128x128xbf16>
    %c0_4 = arith.constant 0 : index
    %c0_5 = arith.constant 0 : index
    %c0_6 = arith.constant 0 : index
    %11 = vector.load %arg3[%c0_4, %c0_5, %c0_6] : memref<9x128x128xbf16, #tpu.memory_space<vmem>>, vector<1x128x128xbf16>
    %12 = vector.shape_cast %11 : vector<1x128x128xbf16> to vector<128x128xbf16>
    %cst_7 = arith.constant dense<0.000000e+00> : vector<128x128xf32>
    %13 = tpu.matmul %10, %12, %cst_7 {dimension_numbers = #tpu.dot_dimension_numbers<[1], [0], [0], [1], [0, 0, 1, 1], [], []>} : vector<128x128xbf16>, vector<128x128xbf16>, vector<128x128xf32> -> vector<128x128xf32>
    %14 = arith.addf %5, %13 : vector<128x128xf32>
    %c0_i32_8 = arith.constant 0 : i32
    %15 = arith.addi %4, %c0_i32_8 : i32
    %c0_9 = arith.constant 0 : index
    %16 = arith.index_cast %15 : i32 to index
    %c1 = arith.constant 1 : index
    %c0_10 = arith.constant 0 : index
    %17 = vector.load %arg2[%c0_9, %16, %c1, %c0_10] : memref<1x18x18x128xbf16, #tpu.memory_space<vmem>>, vector<1x8x16x128xbf16>
    %18 = vector.shape_cast %17 : vector<1x8x16x128xbf16> to vector<8x16x128xbf16>
    %19 = vector.shape_cast %18 : vector<8x16x128xbf16> to vector<128x128xbf16>
    %c1_11 = arith.constant 1 : index
    %c0_12 = arith.constant 0 : index
    %c0_13 = arith.constant 0 : index
    %20 = vector.load %arg3[%c1_11, %c0_12, %c0_13] : memref<9x128x128xbf16, #tpu.memory_space<vmem>>, vector<1x128x128xbf16>
    %21 = vector.shape_cast %20 : vector<1x128x128xbf16> to vector<128x128xbf16>
    %cst_14 = arith.constant dense<0.000000e+00> : vector<128x128xf32>
    %22 = tpu.matmul %19, %21, %cst_14 {dimension_numbers = #tpu.dot_dimension_numbers<[1], [0], [0], [1], [0, 0, 1, 1], [], []>} : vector<128x128xbf16>, vector<128x128xbf16>, vector<128x128xf32> -> vector<128x128xf32>
    %23 = arith.addf %14, %22 : vector<128x128xf32>
    %c0_i32_15 = arith.constant 0 : i32
    %24 = arith.addi %4, %c0_i32_15 : i32
    %c0_16 = arith.constant 0 : index
    %25 = arith.index_cast %24 : i32 to index
    %c2 = arith.constant 2 : index
    %c0_17 = arith.constant 0 : index
    %26 = vector.load %arg2[%c0_16, %25, %c2, %c0_17] : memref<1x18x18x128xbf16, #tpu.memory_space<vmem>>, vector<1x8x16x128xbf16>
    %27 = vector.shape_cast %26 : vector<1x8x16x128xbf16> to vector<8x16x128xbf16>
    %28 = vector.shape_cast %27 : vector<8x16x128xbf16> to vector<128x128xbf16>
    %c2_18 = arith.constant 2 : index
    %c0_19 = arith.constant 0 : index
    %c0_20 = arith.constant 0 : index
    %29 = vector.load %arg3[%c2_18, %c0_19, %c0_20] : memref<9x128x128xbf16, #tpu.memory_space<vmem>>, vector<1x128x128xbf16>
    %30 = vector.shape_cast %29 : vector<1x128x128xbf16> to vector<128x128xbf16>
    %cst_21 = arith.constant dense<0.000000e+00> : vector<128x128xf32>
    %31 = tpu.matmul %28, %30, %cst_21 {dimension_numbers = #tpu.dot_dimension_numbers<[1], [0], [0], [1], [0, 0, 1, 1], [], []>} : vector<128x128xbf16>, vector<128x128xbf16>, vector<128x128xf32> -> vector<128x128xf32>
    %32 = arith.addf %23, %31 : vector<128x128xf32>
    %c1_i32 = arith.constant 1 : i32
    %33 = arith.addi %4, %c1_i32 : i32
    %c0_22 = arith.constant 0 : index
    %34 = arith.index_cast %33 : i32 to index
    %c0_23 = arith.constant 0 : index
    %c0_24 = arith.constant 0 : index
    %35 = vector.load %arg2[%c0_22, %34, %c0_23, %c0_24] : memref<1x18x18x128xbf16, #tpu.memory_space<vmem>>, vector<1x8x16x128xbf16>
    %36 = vector.shape_cast %35 : vector<1x8x16x128xbf16> to vector<8x16x128xbf16>
    %37 = vector.shape_cast %36 : vector<8x16x128xbf16> to vector<128x128xbf16>
    %c3 = arith.constant 3 : index
    %c0_25 = arith.constant 0 : index
    %c0_26 = arith.constant 0 : index
    %38 = vector.load %arg3[%c3, %c0_25, %c0_26] : memref<9x128x128xbf16, #tpu.memory_space<vmem>>, vector<1x128x128xbf16>
    %39 = vector.shape_cast %38 : vector<1x128x128xbf16> to vector<128x128xbf16>
    %cst_27 = arith.constant dense<0.000000e+00> : vector<128x128xf32>
    %40 = tpu.matmul %37, %39, %cst_27 {dimension_numbers = #tpu.dot_dimension_numbers<[1], [0], [0], [1], [0, 0, 1, 1], [], []>} : vector<128x128xbf16>, vector<128x128xbf16>, vector<128x128xf32> -> vector<128x128xf32>
    %41 = arith.addf %32, %40 : vector<128x128xf32>
    %c1_i32_28 = arith.constant 1 : i32
    %42 = arith.addi %4, %c1_i32_28 : i32
    %c0_29 = arith.constant 0 : index
    %43 = arith.index_cast %42 : i32 to index
    %c1_30 = arith.constant 1 : index
    %c0_31 = arith.constant 0 : index
    %44 = vector.load %arg2[%c0_29, %43, %c1_30, %c0_31] : memref<1x18x18x128xbf16, #tpu.memory_space<vmem>>, vector<1x8x16x128xbf16>
    %45 = vector.shape_cast %44 : vector<1x8x16x128xbf16> to vector<8x16x128xbf16>
    %46 = vector.shape_cast %45 : vector<8x16x128xbf16> to vector<128x128xbf16>
    %c4 = arith.constant 4 : index
    %c0_32 = arith.constant 0 : index
    %c0_33 = arith.constant 0 : index
    %47 = vector.load %arg3[%c4, %c0_32, %c0_33] : memref<9x128x128xbf16, #tpu.memory_space<vmem>>, vector<1x128x128xbf16>
    %48 = vector.shape_cast %47 : vector<1x128x128xbf16> to vector<128x128xbf16>
    %cst_34 = arith.constant dense<0.000000e+00> : vector<128x128xf32>
    %49 = tpu.matmul %46, %48, %cst_34 {dimension_numbers = #tpu.dot_dimension_numbers<[1], [0], [0], [1], [0, 0, 1, 1], [], []>} : vector<128x128xbf16>, vector<128x128xbf16>, vector<128x128xf32> -> vector<128x128xf32>
    %50 = arith.addf %41, %49 : vector<128x128xf32>
    %c1_i32_35 = arith.constant 1 : i32
    %51 = arith.addi %4, %c1_i32_35 : i32
    %c0_36 = arith.constant 0 : index
    %52 = arith.index_cast %51 : i32 to index
    %c2_37 = arith.constant 2 : index
    %c0_38 = arith.constant 0 : index
    %53 = vector.load %arg2[%c0_36, %52, %c2_37, %c0_38] : memref<1x18x18x128xbf16, #tpu.memory_space<vmem>>, vector<1x8x16x128xbf16>
    %54 = vector.shape_cast %53 : vector<1x8x16x128xbf16> to vector<8x16x128xbf16>
    %55 = vector.shape_cast %54 : vector<8x16x128xbf16> to vector<128x128xbf16>
    %c5 = arith.constant 5 : index
    %c0_39 = arith.constant 0 : index
    %c0_40 = arith.constant 0 : index
    %56 = vector.load %arg3[%c5, %c0_39, %c0_40] : memref<9x128x128xbf16, #tpu.memory_space<vmem>>, vector<1x128x128xbf16>
    %57 = vector.shape_cast %56 : vector<1x128x128xbf16> to vector<128x128xbf16>
    %cst_41 = arith.constant dense<0.000000e+00> : vector<128x128xf32>
    %58 = tpu.matmul %55, %57, %cst_41 {dimension_numbers = #tpu.dot_dimension_numbers<[1], [0], [0], [1], [0, 0, 1, 1], [], []>} : vector<128x128xbf16>, vector<128x128xbf16>, vector<128x128xf32> -> vector<128x128xf32>
    %59 = arith.addf %50, %58 : vector<128x128xf32>
    %c2_i32 = arith.constant 2 : i32
    %60 = arith.addi %4, %c2_i32 : i32
    %c0_42 = arith.constant 0 : index
    %61 = arith.index_cast %60 : i32 to index
    %c0_43 = arith.constant 0 : index
    %c0_44 = arith.constant 0 : index
    %62 = vector.load %arg2[%c0_42, %61, %c0_43, %c0_44] : memref<1x18x18x128xbf16, #tpu.memory_space<vmem>>, vector<1x8x16x128xbf16>
    %63 = vector.shape_cast %62 : vector<1x8x16x128xbf16> to vector<8x16x128xbf16>
    %64 = vector.shape_cast %63 : vector<8x16x128xbf16> to vector<128x128xbf16>
    %c6 = arith.constant 6 : index
    %c0_45 = arith.constant 0 : index
    %c0_46 = arith.constant 0 : index
    %65 = vector.load %arg3[%c6, %c0_45, %c0_46] : memref<9x128x128xbf16, #tpu.memory_space<vmem>>, vector<1x128x128xbf16>
    %66 = vector.shape_cast %65 : vector<1x128x128xbf16> to vector<128x128xbf16>
    %cst_47 = arith.constant dense<0.000000e+00> : vector<128x128xf32>
    %67 = tpu.matmul %64, %66, %cst_47 {dimension_numbers = #tpu.dot_dimension_numbers<[1], [0], [0], [1], [0, 0, 1, 1], [], []>} : vector<128x128xbf16>, vector<128x128xbf16>, vector<128x128xf32> -> vector<128x128xf32>
    %68 = arith.addf %59, %67 : vector<128x128xf32>
    %c2_i32_48 = arith.constant 2 : i32
    %69 = arith.addi %4, %c2_i32_48 : i32
    %c0_49 = arith.constant 0 : index
    %70 = arith.index_cast %69 : i32 to index
    %c1_50 = arith.constant 1 : index
    %c0_51 = arith.constant 0 : index
    %71 = vector.load %arg2[%c0_49, %70, %c1_50, %c0_51] : memref<1x18x18x128xbf16, #tpu.memory_space<vmem>>, vector<1x8x16x128xbf16>
    %72 = vector.shape_cast %71 : vector<1x8x16x128xbf16> to vector<8x16x128xbf16>
    %73 = vector.shape_cast %72 : vector<8x16x128xbf16> to vector<128x128xbf16>
    %c7 = arith.constant 7 : index
    %c0_52 = arith.constant 0 : index
    %c0_53 = arith.constant 0 : index
    %74 = vector.load %arg3[%c7, %c0_52, %c0_53] : memref<9x128x128xbf16, #tpu.memory_space<vmem>>, vector<1x128x128xbf16>
    %75 = vector.shape_cast %74 : vector<1x128x128xbf16> to vector<128x128xbf16>
    %cst_54 = arith.constant dense<0.000000e+00> : vector<128x128xf32>
    %76 = tpu.matmul %73, %75, %cst_54 {dimension_numbers = #tpu.dot_dimension_numbers<[1], [0], [0], [1], [0, 0, 1, 1], [], []>} : vector<128x128xbf16>, vector<128x128xbf16>, vector<128x128xf32> -> vector<128x128xf32>
    %77 = arith.addf %68, %76 : vector<128x128xf32>
    %c2_i32_55 = arith.constant 2 : i32
    %78 = arith.addi %4, %c2_i32_55 : i32
    %c0_56 = arith.constant 0 : index
    %79 = arith.index_cast %78 : i32 to index
    %c2_57 = arith.constant 2 : index
    %c0_58 = arith.constant 0 : index
    %80 = vector.load %arg2[%c0_56, %79, %c2_57, %c0_58] : memref<1x18x18x128xbf16, #tpu.memory_space<vmem>>, vector<1x8x16x128xbf16>
    %81 = vector.shape_cast %80 : vector<1x8x16x128xbf16> to vector<8x16x128xbf16>
    %82 = vector.shape_cast %81 : vector<8x16x128xbf16> to vector<128x128xbf16>
    %c8 = arith.constant 8 : index
    %c0_59 = arith.constant 0 : index
    %c0_60 = arith.constant 0 : index
    %83 = vector.load %arg3[%c8, %c0_59, %c0_60] : memref<9x128x128xbf16, #tpu.memory_space<vmem>>, vector<1x128x128xbf16>
    %84 = vector.shape_cast %83 : vector<1x128x128xbf16> to vector<128x128xbf16>
    %cst_61 = arith.constant dense<0.000000e+00> : vector<128x128xf32>
    %85 = tpu.matmul %82, %84, %cst_61 {dimension_numbers = #tpu.dot_dimension_numbers<[1], [0], [0], [1], [0, 0, 1, 1], [], []>} : vector<128x128xbf16>, vector<128x128xbf16>, vector<128x128xf32> -> vector<128x128xf32>
    %86 = arith.addf %77, %85 : vector<128x128xf32>
    %c0_62 = arith.constant 0 : index
    %c0_63 = arith.constant 0 : index
    %87 = vector.load %arg4[%c0_62, %c0_63] : memref<1x128xf32, #tpu.memory_space<vmem>>, vector<1x128xf32>
    %88 = vector.broadcast %87 : vector<1x128xf32> to vector<128x128xf32>
    %89 = arith.addf %86, %88 : vector<128x128xf32>
    %c0_64 = arith.constant 0 : index
    %c0_65 = arith.constant 0 : index
    %90 = vector.load %arg8[%c0_64, %c0_65] : memref<1x128xf32, #tpu.memory_space<vmem>>, vector<1x128xf32>
    %cst_66 = arith.constant dense<0.000000e+00> : vector<128xf32>
    %91 = vector.multi_reduction <add>, %89, %cst_66 [0] : vector<128x128xf32> to vector<128xf32>
    %92 = vector.shape_cast %91 : vector<128xf32> to vector<1x128xf32>
    %93 = arith.addf %90, %92 : vector<1x128xf32>
    %c0_67 = arith.constant 0 : index
    %c0_68 = arith.constant 0 : index
    %94 = vector.load %arg8[%c0_67, %c0_68] : memref<1x128xf32, #tpu.memory_space<vmem>>, vector<1x128xf32>
    tpu.vector_store %arg8[%c0_67, %c0_68], %93 {strides = array<i32>} : memref<1x128xf32, #tpu.memory_space<vmem>>, vector<1x128xf32>,
    %c0_69 = arith.constant 0 : index
    %c0_70 = arith.constant 0 : index
    %95 = vector.load %arg9[%c0_69, %c0_70] : memref<1x128xf32, #tpu.memory_space<vmem>>, vector<1x128xf32>
    %96 = arith.mulf %89, %89 : vector<128x128xf32>
    %cst_71 = arith.constant dense<0.000000e+00> : vector<128xf32>
    %97 = vector.multi_reduction <add>, %96, %cst_71 [0] : vector<128x128xf32> to vector<128xf32>
    %98 = vector.shape_cast %97 : vector<128xf32> to vector<1x128xf32>
    %99 = arith.addf %95, %98 : vector<1x128xf32>
    %c0_72 = arith.constant 0 : index
    %c0_73 = arith.constant 0 : index
    %100 = vector.load %arg9[%c0_72, %c0_73] : memref<1x128xf32, #tpu.memory_space<vmem>>, vector<1x128xf32>
    tpu.vector_store %arg9[%c0_72, %c0_73], %99 {strides = array<i32>} : memref<1x128xf32, #tpu.memory_space<vmem>>, vector<1x128xf32>,
    %101 = vector.shape_cast %89 : vector<128x128xf32> to vector<8x16x128xf32>
    %c0_74 = arith.constant 0 : index
    %102 = arith.index_cast %4 : i32 to index
    %c0_75 = arith.constant 0 : index
    %c0_76 = arith.constant 0 : index
    %103 = vector.load %arg7[%c0_74, %102, %c0_75, %c0_76] : memref<1x16x16x128xf32, #tpu.memory_space<vmem>>, vector<1x8x16x128xf32>
    %104 = vector.shape_cast %103 : vector<1x8x16x128xf32> to vector<8x16x128xf32>
    %105 = vector.shape_cast %101 : vector<8x16x128xf32> to vector<1x8x16x128xf32>
    tpu.vector_store %arg7[%c0_74, %102, %c0_75, %c0_76], %105 {strides = array<i32>} : memref<1x16x16x128xf32, #tpu.memory_space<vmem>>, vector<1x8x16x128xf32>,
    %c1_i32_77 = arith.constant 1 : i32
    %106 = arith.cmpi eq, %arg1, %c1_i32_77 : i32
    %107 = arith.extui %106 : i1 to i32
    %c0_i32_78 = arith.constant 0 : i32
    %108 = arith.cmpi ne, %107, %c0_i32_78 : i32
    scf.if %108 {
      %c0_79 = arith.constant 0 : index
      %c0_80 = arith.constant 0 : index
      %109 = vector.load %arg8[%c0_79, %c0_80] : memref<1x128xf32, #tpu.memory_space<vmem>>, vector<1x128xf32>
      %cst_81 = arith.constant 3.906250e-03 : f32
      %110 = vector.broadcast %cst_81 : f32 to vector<1x128xf32>
      %111 = arith.mulf %109, %110 : vector<1x128xf32>
      %c0_82 = arith.constant 0 : index
      %c0_83 = arith.constant 0 : index
      %112 = vector.load %arg9[%c0_82, %c0_83] : memref<1x128xf32, #tpu.memory_space<vmem>>, vector<1x128xf32>
      %cst_84 = arith.constant 3.906250e-03 : f32
      %113 = vector.broadcast %cst_84 : f32 to vector<1x128xf32>
      %114 = arith.mulf %112, %113 : vector<1x128xf32>
      %115 = arith.mulf %111, %111 : vector<1x128xf32>
      %116 = arith.subf %114, %115 : vector<1x128xf32>
      %cst_85 = arith.constant 0.000000e+00 : f32
      %117 = vector.broadcast %cst_85 : f32 to vector<1x128xf32>
      %118 = arith.maximumf %116, %117 : vector<1x128xf32>
      %c0_86 = arith.constant 0 : index
      %c0_87 = arith.constant 0 : index
      %119 = vector.load %arg5[%c0_86, %c0_87] : memref<1x128xf32, #tpu.memory_space<vmem>>, vector<1x128xf32>
      %cst_88 = arith.constant 9.99999974E-6 : f32
      %120 = vector.broadcast %cst_88 : f32 to vector<1x128xf32>
      %121 = arith.addf %118, %120 : vector<1x128xf32>
      %122 = math.rsqrt %121 : vector<1x128xf32>
      %123 = arith.mulf %119, %122 : vector<1x128xf32>
      %c0_89 = arith.constant 0 : index
      %c0_90 = arith.constant 0 : index
      %124 = vector.load %arg6[%c0_89, %c0_90] : memref<1x128xf32, #tpu.memory_space<vmem>>, vector<1x128xf32>
      %125 = arith.mulf %111, %123 : vector<1x128xf32>
      %126 = arith.subf %124, %125 : vector<1x128xf32>
      %c0_91 = arith.constant 0 : index
      %c0_92 = arith.constant 0 : index
      %c0_93 = arith.constant 0 : index
      %c0_94 = arith.constant 0 : index
      %127 = vector.load %arg7[%c0_91, %c0_92, %c0_93, %c0_94] : memref<1x16x16x128xf32, #tpu.memory_space<vmem>>, vector<1x16x16x128xf32>
      %128 = vector.shape_cast %127 : vector<1x16x16x128xf32> to vector<16x16x128xf32>
      %129 = vector.shape_cast %123 : vector<1x128xf32> to vector<1x1x128xf32>
      %130 = vector.broadcast %129 : vector<1x1x128xf32> to vector<16x16x128xf32>
      %131 = arith.mulf %128, %130 : vector<16x16x128xf32>
      %132 = vector.shape_cast %126 : vector<1x128xf32> to vector<1x1x128xf32>
      %133 = vector.broadcast %132 : vector<1x1x128xf32> to vector<16x16x128xf32>
      %134 = arith.addf %131, %133 : vector<16x16x128xf32>
      %cst_95 = arith.constant 0.000000e+00 : f32
      %135 = vector.broadcast %cst_95 : f32 to vector<16x16x128xf32>
      %136 = arith.maximumf %134, %135 : vector<16x16x128xf32>
      %c0_96 = arith.constant 0 : index
      %c0_97 = arith.constant 0 : index
      %c0_98 = arith.constant 0 : index
      %c0_99 = arith.constant 0 : index
      %137 = vector.load %arg7[%c0_96, %c0_97, %c0_98, %c0_99] : memref<1x16x16x128xf32, #tpu.memory_space<vmem>>, vector<1x16x16x128xf32>
      %138 = vector.shape_cast %137 : vector<1x16x16x128xf32> to vector<16x16x128xf32>
      %139 = vector.shape_cast %136 : vector<16x16x128xf32> to vector<1x16x16x128xf32>
      tpu.vector_store %arg7[%c0_96, %c0_97, %c0_98, %c0_99], %139 {strides = array<i32>} : memref<1x16x16x128xf32, #tpu.memory_space<vmem>>, vector<1x16x16x128xf32>,
    } else {
    }
    return
  }
  func.func @transform_0(%arg0: i32, %arg1: i32) -> (i32, i32, i32, i32) {
    %c0_i32 = arith.constant 0 : i32
    %c0_i32_0 = arith.constant 0 : i32
    %c0_i32_1 = arith.constant 0 : i32
    %c0_i32_2 = arith.constant 0 : i32
    return %arg0, %c0_i32, %c0_i32_0, %c0_i32_1 : i32, i32, i32, i32
  }
  func.func @transform_1(%arg0: i32, %arg1: i32) -> (i32, i32, i32) {
    %c0_i32 = arith.constant 0 : i32
    %c0_i32_0 = arith.constant 0 : i32
    %c0_i32_1 = arith.constant 0 : i32
    %c0_i32_2 = arith.constant 0 : i32
    return %c0_i32, %c0_i32_0, %c0_i32_1 : i32, i32, i32
  }
  func.func @transform_2(%arg0: i32, %arg1: i32) -> (i32, i32) {
    %c0_i32 = arith.constant 0 : i32
    %c0_i32_0 = arith.constant 0 : i32
    %c0_i32_1 = arith.constant 0 : i32
    return %c0_i32, %c0_i32_0 : i32, i32
  }
  func.func @transform_3(%arg0: i32, %arg1: i32) -> (i32, i32) {
    %c0_i32 = arith.constant 0 : i32
    %c0_i32_0 = arith.constant 0 : i32
    %c0_i32_1 = arith.constant 0 : i32
    return %c0_i32, %c0_i32_0 : i32, i32
  }
  func.func @transform_4(%arg0: i32, %arg1: i32) -> (i32, i32) {
    %c0_i32 = arith.constant 0 : i32
    %c0_i32_0 = arith.constant 0 : i32
    %c0_i32_1 = arith.constant 0 : i32
    return %c0_i32, %c0_i32_0 : i32, i32
  }
  func.func @transform_5(%arg0: i32, %arg1: i32) -> (i32, i32, i32, i32) {
    %c0_i32 = arith.constant 0 : i32
    %c0_i32_0 = arith.constant 0 : i32
    %c0_i32_1 = arith.constant 0 : i32
    %c0_i32_2 = arith.constant 0 : i32
    return %arg0, %c0_i32, %c0_i32_0, %c0_i32_1 : i32, i32, i32, i32
  }
}

</mosaic_0001>

<llo_original>
// kernel: tpu_custom_call.1
$region0: #{tpu_custom_call.1}
  #allocation0 [shape = 'u32[]', space=smem, size = 0x4, offset = 0x4, fixed_abs, tag = 'smem constant byte address 0x4 - core index']
  #allocation1 [shape = 'u32[72,128]{1,0:T(1,128)}', space=vmem, size = 0x9000, scoped, tag = 'internal scratch']
  #allocation2 [shape = 'f32[1,128]{1,0:T(1,128)}', space=vmem, size = 0x200, scoped, tag = 'scratch operand']
  #allocation3 [shape = 'f32[1,128]{1,0:T(1,128)}', space=vmem, size = 0x200, scoped, tag = 'scratch operand']
  %s0 = inlined_call_operand.vmem [shape: bf16[2,18,18,128], index: 0, kind: input, shape index: {}]
  %s1 = inlined_call_operand.vmem [shape: bf16[9,128,128], index: 1, kind: input, shape index: {}]
  %s2 = inlined_call_operand.vmem [shape: f32[1,128], index: 2, kind: input, shape index: {}]
  %s3 = inlined_call_operand.vmem [shape: f32[1,128], index: 3, kind: input, shape index: {}]
  %s4 = inlined_call_operand.vmem [shape: f32[1,128], index: 4, kind: input, shape index: {}]
  %s5 = inlined_call_operand.hbm [shape: f32[2,16,16,128], index: 5, kind: output, shape index: {}]
  %s6 = sld [smem:[#allocation0]]
  $region61: #{tpu_custom_call.1} parent=0
    _
  %s8 = ssub.s32 1, %s6
  %s9 = scalar_select 0, %s8, %s6
  $region1: #{tpu_custom_call.1} parent=0
    #allocation4 [shape = 'u8[262144]{0}', space=vmem, size = 0x40000, scoped, tag = 'output window, operand 0']
    #allocation5 [shape = 's32[2]{0}', space=sflag, size = 0x8, scoped, tag = 'scoped memory for tpu_custom_call.1']
    %10 = vsyncpa [#allocation5], 0
    %s11 = scalar_lea.sflag [#allocation5], 1
    %12 = vsyncpa %s11, 0
    loop: start=0, step=1, limit=6
    $region2: #{tpu_custom_call.1} parent=1 // loop_pre_header
      _
    $region3: #{tpu_custom_call.1} parent=1 // loop_header
      %s14 = sphi 0, %s18
      %p15 = scmp.ge.s32.totalorder %s14, 6
      %s21 = sphi 0, %s33
      %s22 = sphi 0, %s29
      %s23 = sphi 0, %s21
      %s24 = sphi 0, %s22
      %s25 = sphi 0, %s23
      %s26 = sphi 0, %s24
      %s36 = sphi 0, %s38
      %s39 = sphi 0, %s36
      %s40 = sphi 0, %s39
      %s56 = sphi 0, %s40
      %s60 = sphi 0, %s60
      %s62 = sphi 0, %s60
      %s63 = sphi 0, %s62
      %s77 = sphi 0, %s63
      %s81 = sphi 0, %s81
      %s83 = sphi 0, %s81
      %s84 = sphi 0, %s83
      %s98 = sphi 0, %s84
      %s102 = sphi 0, %s102
      %s104 = sphi 0, %s102
      %s105 = sphi 0, %s104
      %s119 = sphi 0, %s105
      %s123 = sphi 0, %s123
      %s125 = sphi 0, %s123
      %s126 = sphi 0, %s125
      %s140 = sphi 0, %s126
      %s146 = sphi 0, %s148
      %s149 = sphi 0, %s146
      %s150 = sphi 0, %s149
      %s166 = sphi 0, %s150
    $region4: #{tpu_custom_call.1} parent=1 // loop_header_branch
      %17 = sbr.rel (%p15) target = $region8
    $region5: #{tpu_custom_call.1} parent=1 // loop_body
      %s19 = ssub.s32 %s14, 1
      %s20 = ssub.s32 %s14, 2
      %s27 = sadd.s32 1, %s22
      %p28 = scmp.ge.s32.totalorder %s27, 2
      %s29 = scalar_select %p28, 0, %s27
      %s30 = sadd.s32 1, %s21
      %s31 = scalar_select %p28, %s30, %s21
      %p32 = scmp.ge.s32.totalorder %s31, 2
      %s33 = scalar_select %p32, 0, %s31
      %s34 = ssub.s32 %s21, %s33
      %p35 = scmp.eq.s32.totalorder %s34, 0
      %s37 = sadd.s32 %s36, 1
      %s38 = scalar_select %p35, %s36, %s37
      %p41 = pneg %p35
      %p42 = scmp.eq.s32.totalorder %s14, 3
      %p43 = por %p41, %p42
      %p44 = scmp.ne.s32.totalorder %s36, %s39
      %p45 = scmp.eq.s32.totalorder %s14, 0
      %p46 = por %p44, %p45
      %p47 = scmp.ne.s32.totalorder %s36, %s39
      %p48 = scmp.eq.s32.totalorder %s19, 3
      %p49 = por %p47, %p48
      %p50 = scmp.ne.s32.totalorder %s39, %s40
      %p51 = scmp.eq.s32.totalorder %s19, 0
      %p52 = por %p50, %p51
      %p53 = scmp.ne.s32.totalorder %s39, %s40
      %p54 = scmp.eq.s32.totalorder %s20, 3
      %p55 = por %p53, %p54
      %p57 = scmp.ne.s32.totalorder %s40, %s56
      %p58 = scmp.eq.s32.totalorder %s20, 0
      %p59 = por %p57, %p58
      %s61 = sadd.s32 %s60, 1
      %p64 = scmp.eq.s32.totalorder %s14, 3
      %p65 = scmp.ne.s32.totalorder %s60, %s62
      %p66 = scmp.eq.s32.totalorder %s14, 0
      %p67 = por %p65, %p66
      %p68 = scmp.ne.s32.totalorder %s60, %s62
      %p69 = scmp.eq.s32.totalorder %s19, 3
      %p70 = por %p68, %p69
      %p71 = scmp.ne.s32.totalorder %s62, %s63
      %p72 = scmp.eq.s32.totalorder %s19, 0
      %p73 = por %p71, %p72
      %p74 = scmp.ne.s32.totalorder %s62, %s63
      %p75 = scmp.eq.s32.totalorder %s20, 3
      %p76 = por %p74, %p75
      %p78 = scmp.ne.s32.totalorder %s63, %s77
      %p79 = scmp.eq.s32.totalorder %s20, 0
      %p80 = por %p78, %p79
      %s82 = sadd.s32 %s81, 1
      %p85 = scmp.eq.s32.totalorder %s14, 3
      %p86 = scmp.ne.s32.totalorder %s81, %s83
      %p87 = scmp.eq.s32.totalorder %s14, 0
      %p88 = por %p86, %p87
      %p89 = scmp.ne.s32.totalorder %s81, %s83
      %p90 = scmp.eq.s32.totalorder %s19, 3
      %p91 = por %p89, %p90
      %p92 = scmp.ne.s32.totalorder %s83, %s84
      %p93 = scmp.eq.s32.totalorder %s19, 0
      %p94 = por %p92, %p93
      %p95 = scmp.ne.s32.totalorder %s83, %s84
      %p96 = scmp.eq.s32.totalorder %s20, 3
      %p97 = por %p95, %p96
      %p99 = scmp.ne.s32.totalorder %s84, %s98
      %p100 = scmp.eq.s32.totalorder %s20, 0
      %p101 = por %p99, %p100
      %s103 = sadd.s32 %s102, 1
      %p106 = scmp.eq.s32.totalorder %s14, 3
      %p107 = scmp.ne.s32.totalorder %s102, %s104
      %p108 = scmp.eq.s32.totalorder %s14, 0
      %p109 = por %p107, %p108
      %p110 = scmp.ne.s32.totalorder %s102, %s104
      %p111 = scmp.eq.s32.totalorder %s19, 3
      %p112 = por %p110, %p111
      %p113 = scmp.ne.s32.totalorder %s104, %s105
      %p114 = scmp.eq.s32.totalorder %s19, 0
      %p115 = por %p113, %p114
      %p116 = scmp.ne.s32.totalorder %s104, %s105
      %p117 = scmp.eq.s32.totalorder %s20, 3
      %p118 = por %p116, %p117
      %p120 = scmp.ne.s32.totalorder %s105, %s119
      %p121 = scmp.eq.s32.totalorder %s20, 0
      %p122 = por %p120, %p121
      %s124 = sadd.s32 %s123, 1
      %p127 = scmp.eq.s32.totalorder %s14, 3
      %p128 = scmp.ne.s32.totalorder %s123, %s125
      %p129 = scmp.eq.s32.totalorder %s14, 0
      %p130 = por %p128, %p129
      %p131 = scmp.ne.s32.totalorder %s123, %s125
      %p132 = scmp.eq.s32.totalorder %s19, 3
      %p133 = por %p131, %p132
      %p134 = scmp.ne.s32.totalorder %s125, %s126
      %p135 = scmp.eq.s32.totalorder %s19, 0
      %p136 = por %p134, %p135
      %p137 = scmp.ne.s32.totalorder %s125, %s126
      %p138 = scmp.eq.s32.totalorder %s20, 3
      %p139 = por %p137, %p138
      %p141 = scmp.ne.s32.totalorder %s126, %s140
      %p142 = scmp.eq.s32.totalorder %s20, 0
      %p143 = por %p141, %p142
      %s144 = ssub.s32 %s21, %s33
      %p145 = scmp.eq.s32.totalorder %s144, 0
      %s147 = sadd.s32 %s146, 1
      %s148 = scalar_select %p145, %s146, %s147
      %p151 = pneg %p145
      %p152 = scmp.eq.s32.totalorder %s14, 3
      %p153 = por %p151, %p152
      %p154 = scmp.ne.s32.totalorder %s146, %s149
      %p155 = scmp.eq.s32.totalorder %s14, 0
      %p156 = por %p154, %p155
      %p157 = scmp.ne.s32.totalorder %s146, %s149
      %p158 = scmp.eq.s32.totalorder %s19, 3
      %p159 = por %p157, %p158
      %p160 = scmp.ne.s32.totalorder %s149, %s150
      %p161 = scmp.eq.s32.totalorder %s19, 0
      %p162 = por %p160, %p161
      %p163 = scmp.ne.s32.totalorder %s149, %s150
      %p164 = scmp.eq.s32.totalorder %s20, 3
      %p165 = por %p163, %p164
      %p167 = scmp.ne.s32.totalorder %s150, %s166
      %p168 = scmp.eq.s32.totalorder %s20, 0
      %p169 = por %p167, %p168
      %p170 = scmp.le.s32.totalorder 1, %s14
      %p171 = scmp.lt.s32.totalorder %s14, 5
      %p172 = pnand %p170, %p171
      %p173 = pneg %p172
      // Predicated region
      $region9: #{tpu_custom_call.1} parent=5 // pred_check
        _
      $region10: #{tpu_custom_call.1} parent=5 // pred_check_branch
        %175 = sbr.rel (%p172) target = $region12
      $region11: #{tpu_custom_call.1} parent=5 // pred_region
        %s176 = ssub.s32 %s14, 1
        // Predicated region
        $region13: #{tpu_custom_call.1} parent=11 // pred_check
          %p177 = pneg %p73
        $region14: #{tpu_custom_call.1} parent=11 // pred_check_branch
          %179 = sbr.rel (%p177) target = $region16
        $region15: #{tpu_custom_call.1} parent=11 // pred_region
          _
        $region16: #{tpu_custom_call.1} parent=11 // pred_fallthru
          _
        // Predicated region
        $region17: #{tpu_custom_call.1} parent=11 // pred_check
          %p180 = pneg %p94
        $region18: #{tpu_custom_call.1} parent=11 // pred_check_branch
          %182 = sbr.rel (%p180) target = $region20
        $region19: #{tpu_custom_call.1} parent=11 // pred_region
          _
        $region20: #{tpu_custom_call.1} parent=11 // pred_fallthru
          _
        // Predicated region
        $region21: #{tpu_custom_call.1} parent=11 // pred_check
          %p183 = pneg %p115
        $region22: #{tpu_custom_call.1} parent=11 // pred_check_branch
          %185 = sbr.rel (%p183) target = $region24
        $region23: #{tpu_custom_call.1} parent=11 // pred_region
          _
        $region24: #{tpu_custom_call.1} parent=11 // pred_fallthru
          _
        // Predicated region
        $region25: #{tpu_custom_call.1} parent=11 // pred_check
          %p186 = pneg %p136
        $region26: #{tpu_custom_call.1} parent=11 // pred_check_branch
          %188 = sbr.rel (%p186) target = $region28
        $region27: #{tpu_custom_call.1} parent=11 // pred_region
          _
        $region28: #{tpu_custom_call.1} parent=11 // pred_fallthru
          _
      $region12: #{tpu_custom_call.1} parent=5 // pred_fallthru
        _
      %p189 = scmp.lt.s32.totalorder %s14, 4
      // Predicated region
      $region29: #{tpu_custom_call.1} parent=5 // pred_check
        %p190 = pneg %p189
      $region30: #{tpu_custom_call.1} parent=5 // pred_check_branch
        %192 = sbr.rel (%p190) target = $region32
      $region31: #{tpu_custom_call.1} parent=5 // pred_region
        // Predicated region
        $region33: #{tpu_custom_call.1} parent=31 // pred_check
          %p193 = pneg %p46
        $region34: #{tpu_custom_call.1} parent=31 // pred_check_branch
          %195 = sbr.rel (%p193) target = $region36
        $region35: #{tpu_custom_call.1} parent=31 // pred_region
          %p196 = scmp.lt.s32.totalorder %s21, 1
          %s197 = scalar_select %p196, %s21, 1
          %s198 = smul.addr %s197, 54
          %s199 = smul.addr %s198, 4
          %s200 = scalar_lea.vmem %s0, %s199
        $region36: #{tpu_custom_call.1} parent=31 // pred_fallthru
          _
      $region32: #{tpu_custom_call.1} parent=5 // pred_fallthru
        _
      %p201 = scmp.le.s32.totalorder 1, %s14
      %p202 = scmp.lt.s32.totalorder %s14, 5
      %p203 = pnand %p201, %p202
      %p204 = pneg %p203
      // Predicated region
      $region37: #{tpu_custom_call.1} parent=5 // pred_check
        _
      $region38: #{tpu_custom_call.1} parent=5 // pred_check_branch
        %206 = sbr.rel (%p203) target = $region40
      $region39: #{tpu_custom_call.1} parent=5 // pred_region
        %s207 = ssub.s32 %s14, 1
        %p208 = scmp.lt.s32.totalorder %s23, 1
        %s209 = scalar_select %p208, %s23, 1
        %s210 = smul.addr %s209, 54
        %s211 = smul.addr %s210, 4
        %s212 = scalar_lea.vmem %s0, %s211
        %p213 = pneg %p52
        %p214 = pneg %p49
        %p215 = pneg %p73
        %p216 = pneg %p70
        %p217 = pneg %p94
        %p218 = pneg %p91
        %p219 = pneg %p115
        %p220 = pneg %p112
        %p221 = pneg %p136
        %p222 = pneg %p133
        %p223 = pneg %p162
        %p224 = pneg %p159
        %s225 = sand.u32 %s149, 1
        %s226 = scalar_lea.sflag [#allocation5], %s225
        %s227 = sand.u32 %s149, 1
        %s228 = smul.addr %s227, 256
        %s229 = scalar_lea.vmem [#allocation4], %s228
        %p230 = scmp.lt.s32.totalorder %s23, 1
        %s231 = scalar_select %p230, %s23, 1
        %s232 = smul.addr %s231, 54
        %s233 = smul.addr %s232, 4
        %s234 = scalar_lea.vmem %s0, %s233
        %p235 = scmp.eq.s32.totalorder %s24, 0
        // Predicated region
        $region41: #{tpu_custom_call.1} parent=39 // pred_check
          %p236 = pneg %p235
        $region42: #{tpu_custom_call.1} parent=39 // pred_check_branch
          %238 = sbr.rel (%p236) target = $region44
        $region43: #{tpu_custom_call.1} parent=39 // pred_region
          %239 = vst [vmem:[#allocation2] sm:$0x1] 0.0
          %240 = vst [vmem:[#allocation3] sm:$0x1] 0.0
        $region44: #{tpu_custom_call.1} parent=39 // pred_fallthru
          _
        %s241 = smul.u32 %s24, 8
        %s242 = smul.u32 %s241, 3
        %s243 = smul.addr %s242, 4
        %s244 = scalar_lea.vmem %s234, %s243
        %v245 = vld [vmem:[%s244] sm:$0xf]
        %v246 = vld [vmem:[%s244 + $0x4] sm:$0xf]
        %v247 = vld [vmem:[%s244 + $0xc] sm:$0xf]
        %v248 = vld [vmem:[%s244 + $0x10] sm:$0xf]
        %v249 = vld [vmem:[%s244 + $0x18] sm:$0xf]
        %v250 = vld [vmem:[%s244 + $0x1c] sm:$0xf]
        %v251 = vld [vmem:[%s244 + $0x24] sm:$0xf]
        %v252 = vld [vmem:[%s244 + $0x28] sm:$0xf]
        %v253 = vld [vmem:[%s244 + $0x30] sm:$0xf]
        %v254 = vld [vmem:[%s244 + $0x34] sm:$0xf]
        %v255 = vld [vmem:[%s244 + $0x3c] sm:$0xf]
        %v256 = vld [vmem:[%s244 + $0x40] sm:$0xf]
        %v257 = vld [vmem:[%s244 + $0x48] sm:$0xf]
        %v258 = vld [vmem:[%s244 + $0x4c] sm:$0xf]
        %v259 = vld [vmem:[%s244 + $0x54] sm:$0xf]
        %v260 = vld [vmem:[%s244 + $0x58] sm:$0xf]
        %v261 = vld [vmem:[%s1] sm:$0xf]
        %v262 = vld [vmem:[%s1 + $0x4] sm:$0xf]
        %v263 = vld [vmem:[%s1 + $0x8] sm:$0xf]
        %v264 = vld [vmem:[%s1 + $0xc] sm:$0xf]
        %v265 = vld [vmem:[%s1 + $0x10] sm:$0xf]
        %v266 = vld [vmem:[%s1 + $0x14] sm:$0xf]
        %v267 = vld [vmem:[%s1 + $0x18] sm:$0xf]
        %v268 = vld [vmem:[%s1 + $0x1c] sm:$0xf]
        %v269 = vld [vmem:[%s1 + $0x20] sm:$0xf]
        %v270 = vld [vmem:[%s1 + $0x24] sm:$0xf]
        %v271 = vld [vmem:[%s1 + $0x28] sm:$0xf]
        %v272 = vld [vmem:[%s1 + $0x2c] sm:$0xf]
        %v273 = vld [vmem:[%s1 + $0x30] sm:$0xf]
        %v274 = vld [vmem:[%s1 + $0x34] sm:$0xf]
        %v275 = vld [vmem:[%s1 + $0x38] sm:$0xf]
        %v276 = vld [vmem:[%s1 + $0x3c] sm:$0xf]
        %v277 = vld [vmem:[%s244 + $0x8] sm:$0x1]
        %v278 = vld [vmem:[%s244 + $0x14] sm:$0x1]
        %v279 = vld [vmem:[%s244 + $0x20] sm:$0x1]
        %v280 = vld [vmem:[%s244 + $0x2c] sm:$0x1]
        %v281 = vld [vmem:[%s244 + $0x38] sm:$0x1]
        %v282 = vld [vmem:[%s244 + $0x44] sm:$0x1]
        %v283 = vld [vmem:[%s244 + $0x50] sm:$0x1]
        %v284 = vld [vmem:[%s244 + $0x5c] sm:$0x1]
        %vm285 = vsmask.f32 3328
        %vm286 = vsmask.f32 7440
        %vm287 = vmor %vm285, %vm286
        %v289 = vshrl.u32 %v245, 16
        %v291 = vrot.slane %v289, 4
        %v292 = vshll.u32 %v245, 16
        %v294 = vrot.slane %v292, 5
        %v295 = vor.u32 %v291, %v294
        %v296 = vrot.slane %v295, 4
        %v298 = vshll.u32 %v246, 16
        %v300 = vrot.slane %v298, 5
        %v301 = vsel %vm287, %v296, %v300
        %v302 = vshrl.u32 %v246, 16
        %v304 = vrot.slane %v302, 4
        %v305 = vor.u32 %v304, %v300
        %v306 = vrot.slane %v305, 4
        %v308 = vshll.u32 %v277, 16
        %v310 = vrot.slane %v308, 5
        %v311 = vsel %vm287, %v306, %v310
        %v313 = vshrl.u32 %v247, 16
        %v315 = vrot.slane %v313, 4
        %v316 = vshll.u32 %v247, 16
        %v318 = vrot.slane %v316, 5
        %v319 = vor.u32 %v315, %v318
        %v320 = vrot.slane %v319, 4
        %v322 = vshll.u32 %v248, 16
        %v324 = vrot.slane %v322, 5
        %v325 = vsel %vm287, %v320, %v324
        %v326 = vshrl.u32 %v248, 16
        %v328 = vrot.slane %v326, 4
        %v329 = vor.u32 %v328, %v324
        %v330 = vrot.slane %v329, 4
        %v332 = vshll.u32 %v278, 16
        %v334 = vrot.slane %v332, 5
        %v335 = vsel %vm287, %v330, %v334
        %v337 = vshrl.u32 %v249, 16
        %v339 = vrot.slane %v337, 4
        %v340 = vshll.u32 %v249, 16
        %v342 = vrot.slane %v340, 5
        %v343 = vor.u32 %v339, %v342
        %v344 = vrot.slane %v343, 4
        %v346 = vshll.u32 %v250, 16
        %v348 = vrot.slane %v346, 5
        %v349 = vsel %vm287, %v344, %v348
        %v350 = vshrl.u32 %v250, 16
        %v352 = vrot.slane %v350, 4
        %v353 = vor.u32 %v352, %v348
        %v354 = vrot.slane %v353, 4
        %v356 = vshll.u32 %v279, 16
        %v358 = vrot.slane %v356, 5
        %v359 = vsel %vm287, %v354, %v358
        %v361 = vshrl.u32 %v251, 16
        %v363 = vrot.slane %v361, 4
        %v364 = vshll.u32 %v251, 16
        %v366 = vrot.slane %v364, 5
        %v367 = vor.u32 %v363, %v366
        %v368 = vrot.slane %v367, 4
        %v370 = vshll.u32 %v252, 16
        %v372 = vrot.slane %v370, 5
        %v373 = vsel %vm287, %v368, %v372
        %v374 = vshrl.u32 %v252, 16
        %v376 = vrot.slane %v374, 4
        %v377 = vor.u32 %v376, %v372
        %v378 = vrot.slane %v377, 4
        %v380 = vshll.u32 %v280, 16
        %v382 = vrot.slane %v380, 5
        %v383 = vsel %vm287, %v378, %v382
        %v385 = vshrl.u32 %v253, 16
        %v387 = vrot.slane %v385, 4
        %v388 = vshll.u32 %v253, 16
        %v390 = vrot.slane %v388, 5
        %v391 = vor.u32 %v387, %v390
        %v392 = vrot.slane %v391, 4
        %v394 = vshll.u32 %v254, 16
        %v396 = vrot.slane %v394, 5
        %v397 = vsel %vm287, %v392, %v396
        %v398 = vshrl.u32 %v254, 16
        %v400 = vrot.slane %v398, 4
        %v401 = vor.u32 %v400, %v396
        %v402 = vrot.slane %v401, 4
        %v404 = vshll.u32 %v281, 16
        %v406 = vrot.slane %v404, 5
        %v407 = vsel %vm287, %v402, %v406
        %v409 = vshrl.u32 %v255, 16
        %v411 = vrot.slane %v409, 4
        %v412 = vshll.u32 %v255, 16
        %v414 = vrot.slane %v412, 5
        %v415 = vor.u32 %v411, %v414
        %v416 = vrot.slane %v415, 4
        %v418 = vshll.u32 %v256, 16
        %v420 = vrot.slane %v418, 5
        %v421 = vsel %vm287, %v416, %v420
        %v422 = vshrl.u32 %v256, 16
        %v424 = vrot.slane %v422, 4
        %v425 = vor.u32 %v424, %v420
        %v426 = vrot.slane %v425, 4
        %v428 = vshll.u32 %v282, 16
        %v430 = vrot.slane %v428, 5
        %v431 = vsel %vm287, %v426, %v430
        %v433 = vshrl.u32 %v257, 16
        %v435 = vrot.slane %v433, 4
        %v436 = vshll.u32 %v257, 16
        %v438 = vrot.slane %v436, 5
        %v439 = vor.u32 %v435, %v438
        %v440 = vrot.slane %v439, 4
        %v442 = vshll.u32 %v258, 16
        %v444 = vrot.slane %v442, 5
        %v445 = vsel %vm287, %v440, %v444
        %v446 = vshrl.u32 %v258, 16
        %v448 = vrot.slane %v446, 4
        %v449 = vor.u32 %v448, %v444
        %v450 = vrot.slane %v449, 4
        %v452 = vshll.u32 %v283, 16
        %v454 = vrot.slane %v452, 5
        %v455 = vsel %vm287, %v450, %v454
        %v457 = vshrl.u32 %v259, 16
        %v459 = vrot.slane %v457, 4
        %v460 = vshll.u32 %v259, 16
        %v462 = vrot.slane %v460, 5
        %v463 = vor.u32 %v459, %v462
        %v464 = vrot.slane %v463, 4
        %v466 = vshll.u32 %v260, 16
        %v468 = vrot.slane %v466, 5
        %v469 = vsel %vm287, %v464, %v468
        %v470 = vshrl.u32 %v260, 16
        %v472 = vrot.slane %v470, 4
        %v473 = vor.u32 %v472, %v468
        %v474 = vrot.slane %v473, 4
        %v476 = vshll.u32 %v284, 16
        %v478 = vrot.slane %v476, 5
        %v479 = vsel %vm287, %v474, %v478
        %s480 = scalar_lea.vmem %s1, 64
        %v481 = vld [vmem:[%s480] sm:$0xf]
        %v482 = vld [vmem:[%s480 + $0x4] sm:$0xf]
        %v483 = vld [vmem:[%s480 + $0x8] sm:$0xf]
        %v484 = vld [vmem:[%s480 + $0xc] sm:$0xf]
        %v485 = vld [vmem:[%s480 + $0x10] sm:$0xf]
        %v486 = vld [vmem:[%s480 + $0x14] sm:$0xf]
        %v487 = vld [vmem:[%s480 + $0x18] sm:$0xf]
        %v488 = vld [vmem:[%s480 + $0x1c] sm:$0xf]
        %v489 = vld [vmem:[%s480 + $0x20] sm:$0xf]
        %v490 = vld [vmem:[%s480 + $0x24] sm:$0xf]
        %v491 = vld [vmem:[%s480 + $0x28] sm:$0xf]
        %v492 = vld [vmem:[%s480 + $0x2c] sm:$0xf]
        %v493 = vld [vmem:[%s480 + $0x30] sm:$0xf]
        %v494 = vld [vmem:[%s480 + $0x34] sm:$0xf]
        %v495 = vld [vmem:[%s480 + $0x38] sm:$0xf]
        %v496 = vld [vmem:[%s480 + $0x3c] sm:$0xf]
        %v497 = vunpack.c.l.b16 %v301
        %v498 = vunpack.c.l.b16 %v311
        %v499 = vunpack.c.l.b16 %v325
        %v500 = vunpack.c.l.b16 %v335
        %v501 = vunpack.c.l.b16 %v349
        %v502 = vunpack.c.l.b16 %v359
        %v503 = vunpack.c.l.b16 %v373
        %v504 = vunpack.c.l.b16 %v383
        %v505 = vunpack.c.l.b16 %v397
        %v506 = vunpack.c.l.b16 %v407
        %v507 = vunpack.c.l.b16 %v421
        %v508 = vunpack.c.l.b16 %v431
        %v509 = vunpack.c.l.b16 %v445
        %v510 = vunpack.c.l.b16 %v455
        %v511 = vunpack.c.l.b16 %v469
        %v512 = vunpack.c.l.b16 %v479
        %v513 = vpack.c.b16 %v498, %v497
        %v514 = vpack.c.b16 %v500, %v499
        %v515 = vpack.c.b16 %v502, %v501
        %v516 = vpack.c.b16 %v504, %v503
        %v517 = vpack.c.b16 %v506, %v505
        %v518 = vpack.c.b16 %v508, %v507
        %v519 = vpack.c.b16 %v510, %v509
        %v520 = vpack.c.b16 %v512, %v511
        %v545 = vunpack.c.l.b16 %v481
        %v546 = vunpack.c.l.b16 %v482
        %v547 = vunpack.c.l.b16 %v483
        %v548 = vunpack.c.l.b16 %v484
        %v549 = vunpack.c.l.b16 %v485
        %v550 = vunpack.c.l.b16 %v486
        %v551 = vunpack.c.l.b16 %v487
        %v552 = vunpack.c.l.b16 %v488
        %v553 = vunpack.c.l.b16 %v489
        %v554 = vunpack.c.l.b16 %v490
        %v555 = vunpack.c.l.b16 %v491
        %v556 = vunpack.c.l.b16 %v492
        %v557 = vunpack.c.l.b16 %v493
        %v558 = vunpack.c.l.b16 %v494
        %v559 = vunpack.c.l.b16 %v495
        %v560 = vunpack.c.l.b16 %v496
        %v561 = vpack.c.b16 %v546, %v545
        %v562 = vpack.c.b16 %v548, %v547
        %v563 = vpack.c.b16 %v550, %v549
        %v564 = vpack.c.b16 %v552, %v551
        %v565 = vpack.c.b16 %v554, %v553
        %v566 = vpack.c.b16 %v556, %v555
        %v567 = vpack.c.b16 %v558, %v557
        %v568 = vpack.c.b16 %v560, %v559
        %577 = vmatpush.bf16.msra.mxu0 %v568
        %578 = vmatpush.bf16.msra.mxu0 %v567
        %579 = vmatpush.bf16.msra.mxu0 %v566
        %580 = vmatpush.bf16.msra.mxu0 %v565
        %581 = vmatpush.bf16.msra.mxu0 %v564
        %582 = vmatpush.bf16.msra.mxu0 %v563
        %583 = vmatpush.bf16.msra.mxu0 %v562
        %584 = vmatpush.bf16.msra.mxu0 %v561
        %585 = vmatmul.bf16.gmra.mxu0 %v513
        %v586 = vpop.f32.mrf.mxu0
        %v587 = vadd.f32 0.0, %v586
        %v588 = vpop.f32.mrf.mxu0
        %v589 = vadd.f32 0.0, %v588
        %590 = vmatmul.bf16.gmra.mxu0 %v514
        %v591 = vpop.f32.mrf.mxu0
        %v592 = vadd.f32 0.0, %v591
        %v593 = vpop.f32.mrf.mxu0
        %v594 = vadd.f32 0.0, %v593
        %595 = vmatmul.bf16.gmra.mxu0 %v515
        %v596 = vpop.f32.mrf.mxu0
        %v597 = vadd.f32 0.0, %v596
        %v598 = vpop.f32.mrf.mxu0
        %v599 = vadd.f32 0.0, %v598
        %600 = vmatmul.bf16.gmra.mxu0 %v516
        %v601 = vpop.f32.mrf.mxu0
        %v602 = vadd.f32 0.0, %v601
        %v603 = vpop.f32.mrf.mxu0
        %v604 = vadd.f32 0.0, %v603
        %605 = vmatmul.bf16.gmra.mxu0 %v517
        %v606 = vpop.f32.mrf.mxu0
        %v607 = vadd.f32 0.0, %v606
        %v608 = vpop.f32.mrf.mxu0
        %v609 = vadd.f32 0.0, %v608
        %610 = vmatmul.bf16.gmra.mxu0 %v518
        %v611 = vpop.f32.mrf.mxu0
        %v612 = vadd.f32 0.0, %v611
        %v613 = vpop.f32.mrf.mxu0
        %v614 = vadd.f32 0.0, %v613
        %615 = vmatmul.bf16.gmra.mxu0 %v519
        %v616 = vpop.f32.mrf.mxu0
        %v617 = vadd.f32 0.0, %v616
        %v618 = vpop.f32.mrf.mxu0
        %v619 = vadd.f32 0.0, %v618
        %620 = vmatmul.bf16.gmra.mxu0 %v520
        %v621 = vpop.f32.mrf.mxu0
        %v622 = vadd.f32 0.0, %v621
        %v623 = vpop.f32.mrf.mxu0
        %v624 = vadd.f32 0.0, %v623
        %625 = vdwg.mxu0
        %v642 = vunpack.c.l.b16 %v245
        %v643 = vunpack.c.l.b16 %v246
        %v644 = vunpack.c.l.b16 %v247
        %v645 = vunpack.c.l.b16 %v248
        %v646 = vunpack.c.l.b16 %v249
        %v647 = vunpack.c.l.b16 %v250
        %v648 = vunpack.c.l.b16 %v251
        %v649 = vunpack.c.l.b16 %v252
        %v650 = vunpack.c.l.b16 %v253
        %v651 = vunpack.c.l.b16 %v254
        %v652 = vunpack.c.l.b16 %v255
        %v653 = vunpack.c.l.b16 %v256
        %v654 = vunpack.c.l.b16 %v257
        %v655 = vunpack.c.l.b16 %v258
        %v656 = vunpack.c.l.b16 %v259
        %v657 = vunpack.c.l.b16 %v260
        %v658 = vpack.c.b16 %v643, %v642
        %v659 = vpack.c.b16 %v645, %v644
        %v660 = vpack.c.b16 %v647, %v646
        %v661 = vpack.c.b16 %v649, %v648
        %v662 = vpack.c.b16 %v651, %v650
        %v663 = vpack.c.b16 %v653, %v652
        %v664 = vpack.c.b16 %v655, %v654
        %v665 = vpack.c.b16 %v657, %v656
        %v690 = vunpack.c.l.b16 %v261
        %v691 = vunpack.c.l.b16 %v262
        %v692 = vunpack.c.l.b16 %v263
        %v693 = vunpack.c.l.b16 %v264
        %v694 = vunpack.c.l.b16 %v265
        %v695 = vunpack.c.l.b16 %v266
        %v696 = vunpack.c.l.b16 %v267
        %v697 = vunpack.c.l.b16 %v268
        %v698 = vunpack.c.l.b16 %v269
        %v699 = vunpack.c.l.b16 %v270
        %v700 = vunpack.c.l.b16 %v271
        %v701 = vunpack.c.l.b16 %v272
        %v702 = vunpack.c.l.b16 %v273
        %v703 = vunpack.c.l.b16 %v274
        %v704 = vunpack.c.l.b16 %v275
        %v705 = vunpack.c.l.b16 %v276
        %v706 = vpack.c.b16 %v691, %v690
        %v707 = vpack.c.b16 %v693, %v692
        %v708 = vpack.c.b16 %v695, %v694
        %v709 = vpack.c.b16 %v697, %v696
        %v710 = vpack.c.b16 %v699, %v698
        %v711 = vpack.c.b16 %v701, %v700
        %v712 = vpack.c.b16 %v703, %v702
        %v713 = vpack.c.b16 %v705, %v704
        %722 = vmatpush.bf16.msra.mxu0 %v713
        %723 = vmatpush.bf16.msra.mxu0 %v712
        %724 = vmatpush.bf16.msra.mxu0 %v711
        %725 = vmatpush.bf16.msra.mxu0 %v710
        %726 = vmatpush.bf16.msra.mxu0 %v709
        %727 = vmatpush.bf16.msra.mxu0 %v708
        %728 = vmatpush.bf16.msra.mxu0 %v707
        %729 = vmatpush.bf16.msra.mxu0 %v706
        %730 = vmatmul.bf16.gmra.mxu0 %v658
        %v731 = vpop.f32.mrf.mxu0
        %v732 = vadd.f32 %v587, %v731
        %v733 = vpop.f32.mrf.mxu0
        %v734 = vadd.f32 %v589, %v733
        %735 = vmatmul.bf16.gmra.mxu0 %v659
        %v736 = vpop.f32.mrf.mxu0
        %v737 = vadd.f32 %v592, %v736
        %v738 = vpop.f32.mrf.mxu0
        %v739 = vadd.f32 %v594, %v738
        %740 = vmatmul.bf16.gmra.mxu0 %v660
        %v741 = vpop.f32.mrf.mxu0
        %v742 = vadd.f32 %v597, %v741
        %v743 = vpop.f32.mrf.mxu0
        %v744 = vadd.f32 %v599, %v743
        %745 = vmatmul.bf16.gmra.mxu0 %v661
        %v746 = vpop.f32.mrf.mxu0
        %v747 = vadd.f32 %v602, %v746
        %v748 = vpop.f32.mrf.mxu0
        %v749 = vadd.f32 %v604, %v748
        %750 = vmatmul.bf16.gmra.mxu0 %v662
        %v751 = vpop.f32.mrf.mxu0
        %v752 = vadd.f32 %v607, %v751
        %v753 = vpop.f32.mrf.mxu0
        %v754 = vadd.f32 %v609, %v753
        %755 = vmatmul.bf16.gmra.mxu0 %v663
        %v756 = vpop.f32.mrf.mxu0
        %v757 = vadd.f32 %v612, %v756
        %v758 = vpop.f32.mrf.mxu0
        %v759 = vadd.f32 %v614, %v758
        %760 = vmatmul.bf16.gmra.mxu0 %v664
        %v761 = vpop.f32.mrf.mxu0
        %v762 = vadd.f32 %v617, %v761
        %v763 = vpop.f32.mrf.mxu0
        %v764 = vadd.f32 %v619, %v763
        %765 = vmatmul.bf16.gmra.mxu0 %v665
        %v766 = vpop.f32.mrf.mxu0
        %v767 = vadd.f32 %v622, %v766
        %v768 = vpop.f32.mrf.mxu0
        %v769 = vadd.f32 %v624, %v768
        %770 = vdwg.mxu0
        %v771 = vld [vmem:[%s244] sm:$0xe]
        %v772 = vld [vmem:[%s244 + $0xc] sm:$0xe]
        %v773 = vld [vmem:[%s244 + $0x18] sm:$0xe]
        %v774 = vld [vmem:[%s244 + $0x24] sm:$0xe]
        %v775 = vld [vmem:[%s244 + $0x30] sm:$0xe]
        %v776 = vld [vmem:[%s244 + $0x3c] sm:$0xe]
        %v777 = vld [vmem:[%s244 + $0x48] sm:$0xe]
        %v778 = vld [vmem:[%s244 + $0x54] sm:$0xe]
        %vm795 = vcmask 1042432
        %vm796 = vcmask 1046532
        %vm797 = vmor %vm795, %vm796
        %v798 = vrot.slane %v771, 5
        %v799 = vrot.slane %v798, 4
        %v800 = vrot.slane %v246, 5
        %v801 = vsel %vm797, %v799, %v800
        %v802 = vrot.slane %v800, 4
        %v803 = vrot.slane %v277, 5
        %v804 = vsel %vm797, %v802, %v803
        %v805 = vrot.slane %v772, 5
        %v806 = vrot.slane %v805, 4
        %v807 = vrot.slane %v248, 5
        %v808 = vsel %vm797, %v806, %v807
        %v809 = vrot.slane %v807, 4
        %v810 = vrot.slane %v278, 5
        %v811 = vsel %vm797, %v809, %v810
        %v812 = vrot.slane %v773, 5
        %v813 = vrot.slane %v812, 4
        %v814 = vrot.slane %v250, 5
        %v815 = vsel %vm797, %v813, %v814
        %v816 = vrot.slane %v814, 4
        %v817 = vrot.slane %v279, 5
        %v818 = vsel %vm797, %v816, %v817
        %v819 = vrot.slane %v774, 5
        %v820 = vrot.slane %v819, 4
        %v821 = vrot.slane %v252, 5
        %v822 = vsel %vm797, %v820, %v821
        %v823 = vrot.slane %v821, 4
        %v824 = vrot.slane %v280, 5
        %v825 = vsel %vm797, %v823, %v824
        %v826 = vrot.slane %v775, 5
        %v827 = vrot.slane %v826, 4
        %v828 = vrot.slane %v254, 5
        %v829 = vsel %vm797, %v827, %v828
        %v830 = vrot.slane %v828, 4
        %v831 = vrot.slane %v281, 5
        %v832 = vsel %vm797, %v830, %v831
        %v833 = vrot.slane %v776, 5
        %v834 = vrot.slane %v833, 4
        %v835 = vrot.slane %v256, 5
        %v836 = vsel %vm797, %v834, %v835
        %v837 = vrot.slane %v835, 4
        %v838 = vrot.slane %v282, 5
        %v839 = vsel %vm797, %v837, %v838
        %v840 = vrot.slane %v777, 5
        %v841 = vrot.slane %v840, 4
        %v842 = vrot.slane %v258, 5
        %v843 = vsel %vm797, %v841, %v842
        %v844 = vrot.slane %v842, 4
        %v845 = vrot.slane %v283, 5
        %v846 = vsel %vm797, %v844, %v845
        %v847 = vrot.slane %v778, 5
        %v848 = vrot.slane %v847, 4
        %v849 = vrot.slane %v260, 5
        %v850 = vsel %vm797, %v848, %v849
        %v851 = vrot.slane %v849, 4
        %v852 = vrot.slane %v284, 5
        %v853 = vsel %vm797, %v851, %v852
        %s854 = scalar_lea.vmem %s1, 128
        %v855 = vld [vmem:[%s854] sm:$0xf]
        %v856 = vld [vmem:[%s854 + $0x4] sm:$0xf]
        %v857 = vld [vmem:[%s854 + $0x8] sm:$0xf]
        %v858 = vld [vmem:[%s854 + $0xc] sm:$0xf]
        %v859 = vld [vmem:[%s854 + $0x10] sm:$0xf]
        %v860 = vld [vmem:[%s854 + $0x14] sm:$0xf]
        %v861 = vld [vmem:[%s854 + $0x18] sm:$0xf]
        %v862 = vld [vmem:[%s854 + $0x1c] sm:$0xf]
        %v863 = vld [vmem:[%s854 + $0x20] sm:$0xf]
        %v864 = vld [vmem:[%s854 + $0x24] sm:$0xf]
        %v865 = vld [vmem:[%s854 + $0x28] sm:$0xf]
        %v866 = vld [vmem:[%s854 + $0x2c] sm:$0xf]
        %v867 = vld [vmem:[%s854 + $0x30] sm:$0xf]
        %v868 = vld [vmem:[%s854 + $0x34] sm:$0xf]
        %v869 = vld [vmem:[%s854 + $0x38] sm:$0xf]
        %v870 = vld [vmem:[%s854 + $0x3c] sm:$0xf]
        %v871 = vunpack.c.l.b16 %v801
        %v872 = vunpack.c.l.b16 %v804
        %v873 = vunpack.c.l.b16 %v808
        %v874 = vunpack.c.l.b16 %v811
        %v875 = vunpack.c.l.b16 %v815
        %v876 = vunpack.c.l.b16 %v818
        %v877 = vunpack.c.l.b16 %v822
        %v878 = vunpack.c.l.b16 %v825
        %v879 = vunpack.c.l.b16 %v829
        %v880 = vunpack.c.l.b16 %v832
        %v881 = vunpack.c.l.b16 %v836
        %v882 = vunpack.c.l.b16 %v839
        %v883 = vunpack.c.l.b16 %v843
        %v884 = vunpack.c.l.b16 %v846
        %v885 = vunpack.c.l.b16 %v850
        %v886 = vunpack.c.l.b16 %v853
        %v887 = vpack.c.b16 %v872, %v871
        %v888 = vpack.c.b16 %v874, %v873
        %v889 = vpack.c.b16 %v876, %v875
        %v890 = vpack.c.b16 %v878, %v877
        %v891 = vpack.c.b16 %v880, %v879
        %v892 = vpack.c.b16 %v882, %v881
        %v893 = vpack.c.b16 %v884, %v883
        %v894 = vpack.c.b16 %v886, %v885
        %v919 = vunpack.c.l.b16 %v855
        %v920 = vunpack.c.l.b16 %v856
        %v921 = vunpack.c.l.b16 %v857
        %v922 = vunpack.c.l.b16 %v858
        %v923 = vunpack.c.l.b16 %v859
        %v924 = vunpack.c.l.b16 %v860
        %v925 = vunpack.c.l.b16 %v861
        %v926 = vunpack.c.l.b16 %v862
        %v927 = vunpack.c.l.b16 %v863
        %v928 = vunpack.c.l.b16 %v864
        %v929 = vunpack.c.l.b16 %v865
        %v930 = vunpack.c.l.b16 %v866
        %v931 = vunpack.c.l.b16 %v867
        %v932 = vunpack.c.l.b16 %v868
        %v933 = vunpack.c.l.b16 %v869
        %v934 = vunpack.c.l.b16 %v870
        %v935 = vpack.c.b16 %v920, %v919
        %v936 = vpack.c.b16 %v922, %v921
        %v937 = vpack.c.b16 %v924, %v923
        %v938 = vpack.c.b16 %v926, %v925
        %v939 = vpack.c.b16 %v928, %v927
        %v940 = vpack.c.b16 %v930, %v929
        %v941 = vpack.c.b16 %v932, %v931
        %v942 = vpack.c.b16 %v934, %v933
        %951 = vmatpush.bf16.msra.mxu0 %v942
        %952 = vmatpush.bf16.msra.mxu0 %v941
        %953 = vmatpush.bf16.msra.mxu0 %v940
        %954 = vmatpush.bf16.msra.mxu0 %v939
        %955 = vmatpush.bf16.msra.mxu0 %v938
        %956 = vmatpush.bf16.msra.mxu0 %v937
        %957 = vmatpush.bf16.msra.mxu0 %v936
        %958 = vmatpush.bf16.msra.mxu0 %v935
        %959 = vmatmul.bf16.gmra.mxu0 %v887
        %v960 = vpop.f32.mrf.mxu0
        %v961 = vadd.f32 0.0, %v960
        %v962 = vpop.f32.mrf.mxu0
        %v963 = vadd.f32 0.0, %v962
        %964 = vmatmul.bf16.gmra.mxu0 %v888
        %v965 = vpop.f32.mrf.mxu0
        %v966 = vadd.f32 0.0, %v965
        %v967 = vpop.f32.mrf.mxu0
        %v968 = vadd.f32 0.0, %v967
        %969 = vmatmul.bf16.gmra.mxu0 %v889
        %v970 = vpop.f32.mrf.mxu0
        %v971 = vadd.f32 0.0, %v970
        %v972 = vpop.f32.mrf.mxu0
        %v973 = vadd.f32 0.0, %v972
        %974 = vmatmul.bf16.gmra.mxu0 %v890
        %v975 = vpop.f32.mrf.mxu0
        %v976 = vadd.f32 0.0, %v975
        %v977 = vpop.f32.mrf.mxu0
        %v978 = vadd.f32 0.0, %v977
        %979 = vmatmul.bf16.gmra.mxu0 %v891
        %v980 = vpop.f32.mrf.mxu0
        %v981 = vadd.f32 0.0, %v980
        %v982 = vpop.f32.mrf.mxu0
        %v983 = vadd.f32 0.0, %v982
        %984 = vmatmul.bf16.gmra.mxu0 %v892
        %v985 = vpop.f32.mrf.mxu0
        %v986 = vadd.f32 0.0, %v985
        %v987 = vpop.f32.mrf.mxu0
        %v988 = vadd.f32 0.0, %v987
        %989 = vmatmul.bf16.gmra.mxu0 %v893
        %v990 = vpop.f32.mrf.mxu0
        %v991 = vadd.f32 0.0, %v990
        %v992 = vpop.f32.mrf.mxu0
        %v993 = vadd.f32 0.0, %v992
        %994 = vmatmul.bf16.gmra.mxu0 %v894
        %v995 = vpop.f32.mrf.mxu0
        %v996 = vadd.f32 0.0, %v995
        %v997 = vpop.f32.mrf.mxu0
        %v998 = vadd.f32 0.0, %v997
        %999 = vdwg.mxu0
        %v1000 = vadd.f32 %v732, %v961
        %v1001 = vadd.f32 %v734, %v963
        %v1002 = vadd.f32 %v737, %v966
        %v1003 = vadd.f32 %v739, %v968
        %v1004 = vadd.f32 %v742, %v971
        %v1005 = vadd.f32 %v744, %v973
        %v1006 = vadd.f32 %v747, %v976
        %v1007 = vadd.f32 %v749, %v978
        %v1008 = vadd.f32 %v752, %v981
        %v1009 = vadd.f32 %v754, %v983
        %v1010 = vadd.f32 %v757, %v986
        %v1011 = vadd.f32 %v759, %v988
        %v1012 = vadd.f32 %v762, %v991
        %v1013 = vadd.f32 %v764, %v993
        %v1014 = vadd.f32 %v767, %v996
        %v1015 = vadd.f32 %v769, %v998
        %s1016 = sadd.s32 %s241, 1
        %s1017 = smul.u32 %s1016, 3
        %s1018 = smul.addr %s1017, 4
        %s1019 = scalar_lea.vmem %s234, %s1018
        %v1020 = vld [vmem:[%s1019] sm:$0xf]
        %v1021 = vld [vmem:[%s1019 + $0x4] sm:$0xf]
        %v1022 = vld [vmem:[%s1019 + $0xc] sm:$0xf]
        %v1023 = vld [vmem:[%s1019 + $0x10] sm:$0xf]
        %v1024 = vld [vmem:[%s1019 + $0x18] sm:$0xf]
        %v1025 = vld [vmem:[%s1019 + $0x1c] sm:$0xf]
        %v1026 = vld [vmem:[%s1019 + $0x24] sm:$0xf]
        %v1027 = vld [vmem:[%s1019 + $0x28] sm:$0xf]
        %v1028 = vld [vmem:[%s1019 + $0x30] sm:$0xf]
        %v1029 = vld [vmem:[%s1019 + $0x34] sm:$0xf]
        %v1030 = vld [vmem:[%s1019 + $0x3c] sm:$0xf]
        %v1031 = vld [vmem:[%s1019 + $0x40] sm:$0xf]
        %v1032 = vld [vmem:[%s1019 + $0x48] sm:$0xf]
        %v1033 = vld [vmem:[%s1019 + $0x4c] sm:$0xf]
        %v1034 = vld [vmem:[%s1019 + $0x54] sm:$0xf]
        %v1035 = vld [vmem:[%s1019 + $0x58] sm:$0xf]
        %s1036 = scalar_lea.vmem %s1, 192
        %v1037 = vld [vmem:[%s1036] sm:$0xf]
        %v1038 = vld [vmem:[%s1036 + $0x4] sm:$0xf]
        %v1039 = vld [vmem:[%s1036 + $0x8] sm:$0xf]
        %v1040 = vld [vmem:[%s1036 + $0xc] sm:$0xf]
        %v1041 = vld [vmem:[%s1036 + $0x10] sm:$0xf]
        %v1042 = vld [vmem:[%s1036 + $0x14] sm:$0xf]
        %v1043 = vld [vmem:[%s1036 + $0x18] sm:$0xf]
        %v1044 = vld [vmem:[%s1036 + $0x1c] sm:$0xf]
        %v1045 = vld [vmem:[%s1036 + $0x20] sm:$0xf]
        %v1046 = vld [vmem:[%s1036 + $0x24] sm:$0xf]
        %v1047 = vld [vmem:[%s1036 + $0x28] sm:$0xf]
        %v1048 = vld [vmem:[%s1036 + $0x2c] sm:$0xf]
        %v1049 = vld [vmem:[%s1036 + $0x30] sm:$0xf]
        %v1050 = vld [vmem:[%s1036 + $0x34] sm:$0xf]
        %v1051 = vld [vmem:[%s1036 + $0x38] sm:$0xf]
        %v1052 = vld [vmem:[%s1036 + $0x3c] sm:$0xf]
        %v1069 = vunpack.c.l.b16 %v1020
        %v1070 = vunpack.c.l.b16 %v1021
        %v1071 = vunpack.c.l.b16 %v1022
        %v1072 = vunpack.c.l.b16 %v1023
        %v1073 = vunpack.c.l.b16 %v1024
        %v1074 = vunpack.c.l.b16 %v1025
        %v1075 = vunpack.c.l.b16 %v1026
        %v1076 = vunpack.c.l.b16 %v1027
        %v1077 = vunpack.c.l.b16 %v1028
        %v1078 = vunpack.c.l.b16 %v1029
        %v1079 = vunpack.c.l.b16 %v1030
        %v1080 = vunpack.c.l.b16 %v1031
        %v1081 = vunpack.c.l.b16 %v1032
        %v1082 = vunpack.c.l.b16 %v1033
        %v1083 = vunpack.c.l.b16 %v1034
        %v1084 = vunpack.c.l.b16 %v1035
        %v1085 = vpack.c.b16 %v1070, %v1069
        %v1086 = vpack.c.b16 %v1072, %v1071
        %v1087 = vpack.c.b16 %v1074, %v1073
        %v1088 = vpack.c.b16 %v1076, %v1075
        %v1089 = vpack.c.b16 %v1078, %v1077
        %v1090 = vpack.c.b16 %v1080, %v1079
        %v1091 = vpack.c.b16 %v1082, %v1081
        %v1092 = vpack.c.b16 %v1084, %v1083
        %v1117 = vunpack.c.l.b16 %v1037
        %v1118 = vunpack.c.l.b16 %v1038
        %v1119 = vunpack.c.l.b16 %v1039
        %v1120 = vunpack.c.l.b16 %v1040
        %v1121 = vunpack.c.l.b16 %v1041
        %v1122 = vunpack.c.l.b16 %v1042
        %v1123 = vunpack.c.l.b16 %v1043
        %v1124 = vunpack.c.l.b16 %v1044
        %v1125 = vunpack.c.l.b16 %v1045
        %v1126 = vunpack.c.l.b16 %v1046
        %v1127 = vunpack.c.l.b16 %v1047
        %v1128 = vunpack.c.l.b16 %v1048
        %v1129 = vunpack.c.l.b16 %v1049
        %v1130 = vunpack.c.l.b16 %v1050
        %v1131 = vunpack.c.l.b16 %v1051
        %v1132 = vunpack.c.l.b16 %v1052
        %v1133 = vpack.c.b16 %v1118, %v1117
        %v1134 = vpack.c.b16 %v1120, %v1119
        %v1135 = vpack.c.b16 %v1122, %v1121
        %v1136 = vpack.c.b16 %v1124, %v1123
        %v1137 = vpack.c.b16 %v1126, %v1125
        %v1138 = vpack.c.b16 %v1128, %v1127
        %v1139 = vpack.c.b16 %v1130, %v1129
        %v1140 = vpack.c.b16 %v1132, %v1131
        %1149 = vmatpush.bf16.msra.mxu0 %v1140
        %1150 = vmatpush.bf16.msra.mxu0 %v1139
        %1151 = vmatpush.bf16.msra.mxu0 %v1138
        %1152 = vmatpush.bf16.msra.mxu0 %v1137
        %1153 = vmatpush.bf16.msra.mxu0 %v1136
        %1154 = vmatpush.bf16.msra.mxu0 %v1135
        %1155 = vmatpush.bf16.msra.mxu0 %v1134
        %1156 = vmatpush.bf16.msra.mxu0 %v1133
        %1157 = vmatmul.bf16.gmra.mxu0 %v1085
        %v1158 = vpop.f32.mrf.mxu0
        %v1159 = vadd.f32 0.0, %v1158
        %v1160 = vpop.f32.mrf.mxu0
        %v1161 = vadd.f32 0.0, %v1160
        %1162 = vmatmul.bf16.gmra.mxu0 %v1086
        %v1163 = vpop.f32.mrf.mxu0
        %v1164 = vadd.f32 0.0, %v1163
        %v1165 = vpop.f32.mrf.mxu0
        %v1166 = vadd.f32 0.0, %v1165
        %1167 = vmatmul.bf16.gmra.mxu0 %v1087
        %v1168 = vpop.f32.mrf.mxu0
        %v1169 = vadd.f32 0.0, %v1168
        %v1170 = vpop.f32.mrf.mxu0
        %v1171 = vadd.f32 0.0, %v1170
        %1172 = vmatmul.bf16.gmra.mxu0 %v1088
        %v1173 = vpop.f32.mrf.mxu0
        %v1174 = vadd.f32 0.0, %v1173
        %v1175 = vpop.f32.mrf.mxu0
        %v1176 = vadd.f32 0.0, %v1175
        %1177 = vmatmul.bf16.gmra.mxu0 %v1089
        %v1178 = vpop.f32.mrf.mxu0
        %v1179 = vadd.f32 0.0, %v1178
        %v1180 = vpop.f32.mrf.mxu0
        %v1181 = vadd.f32 0.0, %v1180
        %1182 = vmatmul.bf16.gmra.mxu0 %v1090
        %v1183 = vpop.f32.mrf.mxu0
        %v1184 = vadd.f32 0.0, %v1183
        %v1185 = vpop.f32.mrf.mxu0
        %v1186 = vadd.f32 0.0, %v1185
        %1187 = vmatmul.bf16.gmra.mxu0 %v1091
        %v1188 = vpop.f32.mrf.mxu0
        %v1189 = vadd.f32 0.0, %v1188
        %v1190 = vpop.f32.mrf.mxu0
        %v1191 = vadd.f32 0.0, %v1190
        %1192 = vmatmul.bf16.gmra.mxu0 %v1092
        %v1193 = vpop.f32.mrf.mxu0
        %v1194 = vadd.f32 0.0, %v1193
        %v1195 = vpop.f32.mrf.mxu0
        %v1196 = vadd.f32 0.0, %v1195
        %1197 = vdwg.mxu0
        %v1198 = vadd.f32 %v1000, %v1159
        %v1199 = vadd.f32 %v1001, %v1161
        %v1200 = vadd.f32 %v1002, %v1164
        %v1201 = vadd.f32 %v1003, %v1166
        %v1202 = vadd.f32 %v1004, %v1169
        %v1203 = vadd.f32 %v1005, %v1171
        %v1204 = vadd.f32 %v1006, %v1174
        %v1205 = vadd.f32 %v1007, %v1176
        %v1206 = vadd.f32 %v1008, %v1179
        %v1207 = vadd.f32 %v1009, %v1181
        %v1208 = vadd.f32 %v1010, %v1184
        %v1209 = vadd.f32 %v1011, %v1186
        %v1210 = vadd.f32 %v1012, %v1189
        %v1211 = vadd.f32 %v1013, %v1191
        %v1212 = vadd.f32 %v1014, %v1194
        %v1213 = vadd.f32 %v1015, %v1196
        %v1214 = vld [vmem:[%s1019] sm:$0xf]
        %v1215 = vld [vmem:[%s1019 + $0x4] sm:$0xf]
        %v1216 = vld [vmem:[%s1019 + $0x8] sm:$0x1]
        %v1217 = vld [vmem:[%s1019 + $0xc] sm:$0xf]
        %v1218 = vld [vmem:[%s1019 + $0x10] sm:$0xf]
        %v1219 = vld [vmem:[%s1019 + $0x14] sm:$0x1]
        %v1220 = vld [vmem:[%s1019 + $0x18] sm:$0xf]
        %v1221 = vld [vmem:[%s1019 + $0x1c] sm:$0xf]
        %v1222 = vld [vmem:[%s1019 + $0x20] sm:$0x1]
        %v1223 = vld [vmem:[%s1019 + $0x24] sm:$0xf]
        %v1224 = vld [vmem:[%s1019 + $0x28] sm:$0xf]
        %v1225 = vld [vmem:[%s1019 + $0x2c] sm:$0x1]
        %v1226 = vld [vmem:[%s1019 + $0x30] sm:$0xf]
        %v1227 = vld [vmem:[%s1019 + $0x34] sm:$0xf]
        %v1228 = vld [vmem:[%s1019 + $0x38] sm:$0x1]
        %v1229 = vld [vmem:[%s1019 + $0x3c] sm:$0xf]
        %v1230 = vld [vmem:[%s1019 + $0x40] sm:$0xf]
        %v1231 = vld [vmem:[%s1019 + $0x44] sm:$0x1]
        %v1232 = vld [vmem:[%s1019 + $0x48] sm:$0xf]
        %v1233 = vld [vmem:[%s1019 + $0x4c] sm:$0xf]
        %v1234 = vld [vmem:[%s1019 + $0x50] sm:$0x1]
        %v1235 = vld [vmem:[%s1019 + $0x54] sm:$0xf]
        %v1236 = vld [vmem:[%s1019 + $0x58] sm:$0xf]
        %v1237 = vld [vmem:[%s1019 + $0x5c] sm:$0x1]
        %v1239 = vshrl.u32 %v1214, 16
        %v1241 = vrot.slane %v1239, 4
        %v1242 = vshll.u32 %v1214, 16
        %v1244 = vrot.slane %v1242, 5
        %v1245 = vor.u32 %v1241, %v1244
        %v1246 = vrot.slane %v1245, 4
        %v1248 = vshll.u32 %v1215, 16
        %v1250 = vrot.slane %v1248, 5
        %v1251 = vsel %vm287, %v1246, %v1250
        %v1252 = vshrl.u32 %v1215, 16
        %v1254 = vrot.slane %v1252, 4
        %v1255 = vor.u32 %v1254, %v1250
        %v1256 = vrot.slane %v1255, 4
        %v1258 = vshll.u32 %v1216, 16
        %v1260 = vrot.slane %v1258, 5
        %v1261 = vsel %vm287, %v1256, %v1260
        %v1263 = vshrl.u32 %v1217, 16
        %v1265 = vrot.slane %v1263, 4
        %v1266 = vshll.u32 %v1217, 16
        %v1268 = vrot.slane %v1266, 5
        %v1269 = vor.u32 %v1265, %v1268
        %v1270 = vrot.slane %v1269, 4
        %v1272 = vshll.u32 %v1218, 16
        %v1274 = vrot.slane %v1272, 5
        %v1275 = vsel %vm287, %v1270, %v1274
        %v1276 = vshrl.u32 %v1218, 16
        %v1278 = vrot.slane %v1276, 4
        %v1279 = vor.u32 %v1278, %v1274
        %v1280 = vrot.slane %v1279, 4
        %v1282 = vshll.u32 %v1219, 16
        %v1284 = vrot.slane %v1282, 5
        %v1285 = vsel %vm287, %v1280, %v1284
        %v1287 = vshrl.u32 %v1220, 16
        %v1289 = vrot.slane %v1287, 4
        %v1290 = vshll.u32 %v1220, 16
        %v1292 = vrot.slane %v1290, 5
        %v1293 = vor.u32 %v1289, %v1292
        %v1294 = vrot.slane %v1293, 4
        %v1296 = vshll.u32 %v1221, 16
        %v1298 = vrot.slane %v1296, 5
        %v1299 = vsel %vm287, %v1294, %v1298
        %v1300 = vshrl.u32 %v1221, 16
        %v1302 = vrot.slane %v1300, 4
        %v1303 = vor.u32 %v1302, %v1298
        %v1304 = vrot.slane %v1303, 4
        %v1306 = vshll.u32 %v1222, 16
        %v1308 = vrot.slane %v1306, 5
        %v1309 = vsel %vm287, %v1304, %v1308
        %v1311 = vshrl.u32 %v1223, 16
        %v1313 = vrot.slane %v1311, 4
        %v1314 = vshll.u32 %v1223, 16
        %v1316 = vrot.slane %v1314, 5
        %v1317 = vor.u32 %v1313, %v1316
        %v1318 = vrot.slane %v1317, 4
        %v1320 = vshll.u32 %v1224, 16
        %v1322 = vrot.slane %v1320, 5
        %v1323 = vsel %vm287, %v1318, %v1322
        %v1324 = vshrl.u32 %v1224, 16
        %v1326 = vrot.slane %v1324, 4
        %v1327 = vor.u32 %v1326, %v1322
        %v1328 = vrot.slane %v1327, 4
        %v1330 = vshll.u32 %v1225, 16
        %v1332 = vrot.slane %v1330, 5
        %v1333 = vsel %vm287, %v1328, %v1332
        %v1335 = vshrl.u32 %v1226, 16
        %v1337 = vrot.slane %v1335, 4
        %v1338 = vshll.u32 %v1226, 16
        %v1340 = vrot.slane %v1338, 5
        %v1341 = vor.u32 %v1337, %v1340
        %v1342 = vrot.slane %v1341, 4
        %v1344 = vshll.u32 %v1227, 16
        %v1346 = vrot.slane %v1344, 5
        %v1347 = vsel %vm287, %v1342, %v1346
        %v1348 = vshrl.u32 %v1227, 16
        %v1350 = vrot.slane %v1348, 4
        %v1351 = vor.u32 %v1350, %v1346
        %v1352 = vrot.slane %v1351, 4
        %v1354 = vshll.u32 %v1228, 16
        %v1356 = vrot.slane %v1354, 5
        %v1357 = vsel %vm287, %v1352, %v1356
        %v1359 = vshrl.u32 %v1229, 16
        %v1361 = vrot.slane %v1359, 4
        %v1362 = vshll.u32 %v1229, 16
        %v1364 = vrot.slane %v1362, 5
        %v1365 = vor.u32 %v1361, %v1364
        %v1366 = vrot.slane %v1365, 4
        %v1368 = vshll.u32 %v1230, 16
        %v1370 = vrot.slane %v1368, 5
        %v1371 = vsel %vm287, %v1366, %v1370
        %v1372 = vshrl.u32 %v1230, 16
        %v1374 = vrot.slane %v1372, 4
        %v1375 = vor.u32 %v1374, %v1370
        %v1376 = vrot.slane %v1375, 4
        %v1378 = vshll.u32 %v1231, 16
        %v1380 = vrot.slane %v1378, 5
        %v1381 = vsel %vm287, %v1376, %v1380
        %v1383 = vshrl.u32 %v1232, 16
        %v1385 = vrot.slane %v1383, 4
        %v1386 = vshll.u32 %v1232, 16
        %v1388 = vrot.slane %v1386, 5
        %v1389 = vor.u32 %v1385, %v1388
        %v1390 = vrot.slane %v1389, 4
        %v1392 = vshll.u32 %v1233, 16
        %v1394 = vrot.slane %v1392, 5
        %v1395 = vsel %vm287, %v1390, %v1394
        %v1396 = vshrl.u32 %v1233, 16
        %v1398 = vrot.slane %v1396, 4
        %v1399 = vor.u32 %v1398, %v1394
        %v1400 = vrot.slane %v1399, 4
        %v1402 = vshll.u32 %v1234, 16
        %v1404 = vrot.slane %v1402, 5
        %v1405 = vsel %vm287, %v1400, %v1404
        %v1407 = vshrl.u32 %v1235, 16
        %v1409 = vrot.slane %v1407, 4
        %v1410 = vshll.u32 %v1235, 16
        %v1412 = vrot.slane %v1410, 5
        %v1413 = vor.u32 %v1409, %v1412
        %v1414 = vrot.slane %v1413, 4
        %v1416 = vshll.u32 %v1236, 16
        %v1418 = vrot.slane %v1416, 5
        %v1419 = vsel %vm287, %v1414, %v1418
        %v1420 = vshrl.u32 %v1236, 16
        %v1422 = vrot.slane %v1420, 4
        %v1423 = vor.u32 %v1422, %v1418
        %v1424 = vrot.slane %v1423, 4
        %v1426 = vshll.u32 %v1237, 16
        %v1428 = vrot.slane %v1426, 5
        %v1429 = vsel %vm287, %v1424, %v1428
        %s1430 = scalar_lea.vmem %s1, 256
        %v1431 = vld [vmem:[%s1430] sm:$0xf]
        %v1432 = vld [vmem:[%s1430 + $0x4] sm:$0xf]
        %v1433 = vld [vmem:[%s1430 + $0x8] sm:$0xf]
        %v1434 = vld [vmem:[%s1430 + $0xc] sm:$0xf]
        %v1435 = vld [vmem:[%s1430 + $0x10] sm:$0xf]
        %v1436 = vld [vmem:[%s1430 + $0x14] sm:$0xf]
        %v1437 = vld [vmem:[%s1430 + $0x18] sm:$0xf]
        %v1438 = vld [vmem:[%s1430 + $0x1c] sm:$0xf]
        %v1439 = vld [vmem:[%s1430 + $0x20] sm:$0xf]
        %v1440 = vld [vmem:[%s1430 + $0x24] sm:$0xf]
        %v1441 = vld [vmem:[%s1430 + $0x28] sm:$0xf]
        %v1442 = vld [vmem:[%s1430 + $0x2c] sm:$0xf]
        %v1443 = vld [vmem:[%s1430 + $0x30] sm:$0xf]
        %v1444 = vld [vmem:[%s1430 + $0x34] sm:$0xf]
        %v1445 = vld [vmem:[%s1430 + $0x38] sm:$0xf]
        %v1446 = vld [vmem:[%s1430 + $0x3c] sm:$0xf]
        %v1447 = vunpack.c.l.b16 %v1251
        %v1448 = vunpack.c.l.b16 %v1261
        %v1449 = vunpack.c.l.b16 %v1275
        %v1450 = vunpack.c.l.b16 %v1285
        %v1451 = vunpack.c.l.b16 %v1299
        %v1452 = vunpack.c.l.b16 %v1309
        %v1453 = vunpack.c.l.b16 %v1323
        %v1454 = vunpack.c.l.b16 %v1333
        %v1455 = vunpack.c.l.b16 %v1347
        %v1456 = vunpack.c.l.b16 %v1357
        %v1457 = vunpack.c.l.b16 %v1371
        %v1458 = vunpack.c.l.b16 %v1381
        %v1459 = vunpack.c.l.b16 %v1395
        %v1460 = vunpack.c.l.b16 %v1405
        %v1461 = vunpack.c.l.b16 %v1419
        %v1462 = vunpack.c.l.b16 %v1429
        %v1463 = vpack.c.b16 %v1448, %v1447
        %v1464 = vpack.c.b16 %v1450, %v1449
        %v1465 = vpack.c.b16 %v1452, %v1451
        %v1466 = vpack.c.b16 %v1454, %v1453
        %v1467 = vpack.c.b16 %v1456, %v1455
        %v1468 = vpack.c.b16 %v1458, %v1457
        %v1469 = vpack.c.b16 %v1460, %v1459
        %v1470 = vpack.c.b16 %v1462, %v1461
        %v1495 = vunpack.c.l.b16 %v1431
        %v1496 = vunpack.c.l.b16 %v1432
        %v1497 = vunpack.c.l.b16 %v1433
        %v1498 = vunpack.c.l.b16 %v1434
        %v1499 = vunpack.c.l.b16 %v1435
        %v1500 = vunpack.c.l.b16 %v1436
        %v1501 = vunpack.c.l.b16 %v1437
        %v1502 = vunpack.c.l.b16 %v1438
        %v1503 = vunpack.c.l.b16 %v1439
        %v1504 = vunpack.c.l.b16 %v1440
        %v1505 = vunpack.c.l.b16 %v1441
        %v1506 = vunpack.c.l.b16 %v1442
        %v1507 = vunpack.c.l.b16 %v1443
        %v1508 = vunpack.c.l.b16 %v1444
        %v1509 = vunpack.c.l.b16 %v1445
        %v1510 = vunpack.c.l.b16 %v1446
        %v1511 = vpack.c.b16 %v1496, %v1495
        %v1512 = vpack.c.b16 %v1498, %v1497
        %v1513 = vpack.c.b16 %v1500, %v1499
        %v1514 = vpack.c.b16 %v1502, %v1501
        %v1515 = vpack.c.b16 %v1504, %v1503
        %v1516 = vpack.c.b16 %v1506, %v1505
        %v1517 = vpack.c.b16 %v1508, %v1507
        %v1518 = vpack.c.b16 %v1510, %v1509
        %1527 = vmatpush.bf16.msra.mxu0 %v1518
        %1528 = vmatpush.bf16.msra.mxu0 %v1517
        %1529 = vmatpush.bf16.msra.mxu0 %v1516
        %1530 = vmatpush.bf16.msra.mxu0 %v1515
        %1531 = vmatpush.bf16.msra.mxu0 %v1514
        %1532 = vmatpush.bf16.msra.mxu0 %v1513
        %1533 = vmatpush.bf16.msra.mxu0 %v1512
        %1534 = vmatpush.bf16.msra.mxu0 %v1511
        %1535 = vmatmul.bf16.gmra.mxu0 %v1463
        %v1536 = vpop.f32.mrf.mxu0
        %v1537 = vadd.f32 0.0, %v1536
        %v1538 = vpop.f32.mrf.mxu0
        %v1539 = vadd.f32 0.0, %v1538
        %1540 = vmatmul.bf16.gmra.mxu0 %v1464
        %v1541 = vpop.f32.mrf.mxu0
        %v1542 = vadd.f32 0.0, %v1541
        %v1543 = vpop.f32.mrf.mxu0
        %v1544 = vadd.f32 0.0, %v1543
        %1545 = vmatmul.bf16.gmra.mxu0 %v1465
        %v1546 = vpop.f32.mrf.mxu0
        %v1547 = vadd.f32 0.0, %v1546
        %v1548 = vpop.f32.mrf.mxu0
        %v1549 = vadd.f32 0.0, %v1548
        %1550 = vmatmul.bf16.gmra.mxu0 %v1466
        %v1551 = vpop.f32.mrf.mxu0
        %v1552 = vadd.f32 0.0, %v1551
        %v1553 = vpop.f32.mrf.mxu0
        %v1554 = vadd.f32 0.0, %v1553
        %1555 = vmatmul.bf16.gmra.mxu0 %v1467
        %v1556 = vpop.f32.mrf.mxu0
        %v1557 = vadd.f32 0.0, %v1556
        %v1558 = vpop.f32.mrf.mxu0
        %v1559 = vadd.f32 0.0, %v1558
        %1560 = vmatmul.bf16.gmra.mxu0 %v1468
        %v1561 = vpop.f32.mrf.mxu0
        %v1562 = vadd.f32 0.0, %v1561
        %v1563 = vpop.f32.mrf.mxu0
        %v1564 = vadd.f32 0.0, %v1563
        %1565 = vmatmul.bf16.gmra.mxu0 %v1469
        %v1566 = vpop.f32.mrf.mxu0
        %v1567 = vadd.f32 0.0, %v1566
        %v1568 = vpop.f32.mrf.mxu0
        %v1569 = vadd.f32 0.0, %v1568
        %1570 = vmatmul.bf16.gmra.mxu0 %v1470
        %v1571 = vpop.f32.mrf.mxu0
        %v1572 = vadd.f32 0.0, %v1571
        %v1573 = vpop.f32.mrf.mxu0
        %v1574 = vadd.f32 0.0, %v1573
        %1575 = vdwg.mxu0
        %v1576 = vadd.f32 %v1198, %v1537
        %v1577 = vadd.f32 %v1199, %v1539
        %v1578 = vadd.f32 %v1200, %v1542
        %v1579 = vadd.f32 %v1201, %v1544
        %v1580 = vadd.f32 %v1202, %v1547
        %v1581 = vadd.f32 %v1203, %v1549
        %v1582 = vadd.f32 %v1204, %v1552
        %v1583 = vadd.f32 %v1205, %v1554
        %v1584 = vadd.f32 %v1206, %v1557
        %v1585 = vadd.f32 %v1207, %v1559
        %v1586 = vadd.f32 %v1208, %v1562
        %v1587 = vadd.f32 %v1209, %v1564
        %v1588 = vadd.f32 %v1210, %v1567
        %v1589 = vadd.f32 %v1211, %v1569
        %v1590 = vadd.f32 %v1212, %v1572
        %v1591 = vadd.f32 %v1213, %v1574
        %v1592 = vld [vmem:[%s1019] sm:$0xe]
        %v1593 = vld [vmem:[%s1019 + $0xc] sm:$0xe]
        %v1594 = vld [vmem:[%s1019 + $0x18] sm:$0xe]
        %v1595 = vld [vmem:[%s1019 + $0x24] sm:$0xe]
        %v1596 = vld [vmem:[%s1019 + $0x30] sm:$0xe]
        %v1597 = vld [vmem:[%s1019 + $0x3c] sm:$0xe]
        %v1598 = vld [vmem:[%s1019 + $0x48] sm:$0xe]
        %v1599 = vld [vmem:[%s1019 + $0x54] sm:$0xe]
        %v1624 = vrot.slane %v1592, 5
        %v1625 = vrot.slane %v1624, 4
        %v1626 = vrot.slane %v1215, 5
        %v1627 = vsel %vm797, %v1625, %v1626
        %v1628 = vrot.slane %v1626, 4
        %v1629 = vrot.slane %v1216, 5
        %v1630 = vsel %vm797, %v1628, %v1629
        %v1631 = vrot.slane %v1593, 5
        %v1632 = vrot.slane %v1631, 4
        %v1633 = vrot.slane %v1218, 5
        %v1634 = vsel %vm797, %v1632, %v1633
        %v1635 = vrot.slane %v1633, 4
        %v1636 = vrot.slane %v1219, 5
        %v1637 = vsel %vm797, %v1635, %v1636
        %v1638 = vrot.slane %v1594, 5
        %v1639 = vrot.slane %v1638, 4
        %v1640 = vrot.slane %v1221, 5
        %v1641 = vsel %vm797, %v1639, %v1640
        %v1642 = vrot.slane %v1640, 4
        %v1643 = vrot.slane %v1222, 5
        %v1644 = vsel %vm797, %v1642, %v1643
        %v1645 = vrot.slane %v1595, 5
        %v1646 = vrot.slane %v1645, 4
        %v1647 = vrot.slane %v1224, 5
        %v1648 = vsel %vm797, %v1646, %v1647
        %v1649 = vrot.slane %v1647, 4
        %v1650 = vrot.slane %v1225, 5
        %v1651 = vsel %vm797, %v1649, %v1650
        %v1652 = vrot.slane %v1596, 5
        %v1653 = vrot.slane %v1652, 4
        %v1654 = vrot.slane %v1227, 5
        %v1655 = vsel %vm797, %v1653, %v1654
        %v1656 = vrot.slane %v1654, 4
        %v1657 = vrot.slane %v1228, 5
        %v1658 = vsel %vm797, %v1656, %v1657
        %v1659 = vrot.slane %v1597, 5
        %v1660 = vrot.slane %v1659, 4
        %v1661 = vrot.slane %v1230, 5
        %v1662 = vsel %vm797, %v1660, %v1661
        %v1663 = vrot.slane %v1661, 4
        %v1664 = vrot.slane %v1231, 5
        %v1665 = vsel %vm797, %v1663, %v1664
        %v1666 = vrot.slane %v1598, 5
        %v1667 = vrot.slane %v1666, 4
        %v1668 = vrot.slane %v1233, 5
        %v1669 = vsel %vm797, %v1667, %v1668
        %v1670 = vrot.slane %v1668, 4
        %v1671 = vrot.slane %v1234, 5
        %v1672 = vsel %vm797, %v1670, %v1671
        %v1673 = vrot.slane %v1599, 5
        %v1674 = vrot.slane %v1673, 4
        %v1675 = vrot.slane %v1236, 5
        %v1676 = vsel %vm797, %v1674, %v1675
        %v1677 = vrot.slane %v1675, 4
        %v1678 = vrot.slane %v1237, 5
        %v1679 = vsel %vm797, %v1677, %v1678
        %s1680 = scalar_lea.vmem %s1, 320
        %v1681 = vld [vmem:[%s1680] sm:$0xf]
        %v1682 = vld [vmem:[%s1680 + $0x4] sm:$0xf]
        %v1683 = vld [vmem:[%s1680 + $0x8] sm:$0xf]
        %v1684 = vld [vmem:[%s1680 + $0xc] sm:$0xf]
        %v1685 = vld [vmem:[%s1680 + $0x10] sm:$0xf]
        %v1686 = vld [vmem:[%s1680 + $0x14] sm:$0xf]
        %v1687 = vld [vmem:[%s1680 + $0x18] sm:$0xf]
        %v1688 = vld [vmem:[%s1680 + $0x1c] sm:$0xf]
        %v1689 = vld [vmem:[%s1680 + $0x20] sm:$0xf]
        %v1690 = vld [vmem:[%s1680 + $0x24] sm:$0xf]
        %v1691 = vld [vmem:[%s1680 + $0x28] sm:$0xf]
        %v1692 = vld [vmem:[%s1680 + $0x2c] sm:$0xf]
        %v1693 = vld [vmem:[%s1680 + $0x30] sm:$0xf]
        %v1694 = vld [vmem:[%s1680 + $0x34] sm:$0xf]
        %v1695 = vld [vmem:[%s1680 + $0x38] sm:$0xf]
        %v1696 = vld [vmem:[%s1680 + $0x3c] sm:$0xf]
        %v1697 = vunpack.c.l.b16 %v1627
        %v1698 = vunpack.c.l.b16 %v1630
        %v1699 = vunpack.c.l.b16 %v1634
        %v1700 = vunpack.c.l.b16 %v1637
        %v1701 = vunpack.c.l.b16 %v1641
        %v1702 = vunpack.c.l.b16 %v1644
        %v1703 = vunpack.c.l.b16 %v1648
        %v1704 = vunpack.c.l.b16 %v1651
        %v1705 = vunpack.c.l.b16 %v1655
        %v1706 = vunpack.c.l.b16 %v1658
        %v1707 = vunpack.c.l.b16 %v1662
        %v1708 = vunpack.c.l.b16 %v1665
        %v1709 = vunpack.c.l.b16 %v1669
        %v1710 = vunpack.c.l.b16 %v1672
        %v1711 = vunpack.c.l.b16 %v1676
        %v1712 = vunpack.c.l.b16 %v1679
        %v1713 = vpack.c.b16 %v1698, %v1697
        %v1714 = vpack.c.b16 %v1700, %v1699
        %v1715 = vpack.c.b16 %v1702, %v1701
        %v1716 = vpack.c.b16 %v1704, %v1703
        %v1717 = vpack.c.b16 %v1706, %v1705
        %v1718 = vpack.c.b16 %v1708, %v1707
        %v1719 = vpack.c.b16 %v1710, %v1709
        %v1720 = vpack.c.b16 %v1712, %v1711
        %v1745 = vunpack.c.l.b16 %v1681
        %v1746 = vunpack.c.l.b16 %v1682
        %v1747 = vunpack.c.l.b16 %v1683
        %v1748 = vunpack.c.l.b16 %v1684
        %v1749 = vunpack.c.l.b16 %v1685
        %v1750 = vunpack.c.l.b16 %v1686
        %v1751 = vunpack.c.l.b16 %v1687
        %v1752 = vunpack.c.l.b16 %v1688
        %v1753 = vunpack.c.l.b16 %v1689
        %v1754 = vunpack.c.l.b16 %v1690
        %v1755 = vunpack.c.l.b16 %v1691
        %v1756 = vunpack.c.l.b16 %v1692
        %v1757 = vunpack.c.l.b16 %v1693
        %v1758 = vunpack.c.l.b16 %v1694
        %v1759 = vunpack.c.l.b16 %v1695
        %v1760 = vunpack.c.l.b16 %v1696
        %v1761 = vpack.c.b16 %v1746, %v1745
        %v1762 = vpack.c.b16 %v1748, %v1747
        %v1763 = vpack.c.b16 %v1750, %v1749
        %v1764 = vpack.c.b16 %v1752, %v1751
        %v1765 = vpack.c.b16 %v1754, %v1753
        %v1766 = vpack.c.b16 %v1756, %v1755
        %v1767 = vpack.c.b16 %v1758, %v1757
        %v1768 = vpack.c.b16 %v1760, %v1759
        %1777 = vmatpush.bf16.msra.mxu0 %v1768
        %1778 = vmatpush.bf16.msra.mxu0 %v1767
        %1779 = vmatpush.bf16.msra.mxu0 %v1766
        %1780 = vmatpush.bf16.msra.mxu0 %v1765
        %1781 = vmatpush.bf16.msra.mxu0 %v1764
        %1782 = vmatpush.bf16.msra.mxu0 %v1763
        %1783 = vmatpush.bf16.msra.mxu0 %v1762
        %1784 = vmatpush.bf16.msra.mxu0 %v1761
        %1785 = vmatmul.bf16.gmra.mxu0 %v1713
        %v1786 = vpop.f32.mrf.mxu0
        %v1787 = vadd.f32 0.0, %v1786
        %v1788 = vpop.f32.mrf.mxu0
        %v1789 = vadd.f32 0.0, %v1788
        %1790 = vmatmul.bf16.gmra.mxu0 %v1714
        %v1791 = vpop.f32.mrf.mxu0
        %v1792 = vadd.f32 0.0, %v1791
        %v1793 = vpop.f32.mrf.mxu0
        %v1794 = vadd.f32 0.0, %v1793
        %1795 = vmatmul.bf16.gmra.mxu0 %v1715
        %v1796 = vpop.f32.mrf.mxu0
        %v1797 = vadd.f32 0.0, %v1796
        %v1798 = vpop.f32.mrf.mxu0
        %v1799 = vadd.f32 0.0, %v1798
        %1800 = vmatmul.bf16.gmra.mxu0 %v1716
        %v1801 = vpop.f32.mrf.mxu0
        %v1802 = vadd.f32 0.0, %v1801
        %v1803 = vpop.f32.mrf.mxu0
        %v1804 = vadd.f32 0.0, %v1803
        %1805 = vmatmul.bf16.gmra.mxu0 %v1717
        %v1806 = vpop.f32.mrf.mxu0
        %v1807 = vadd.f32 0.0, %v1806
        %v1808 = vpop.f32.mrf.mxu0
        %v1809 = vadd.f32 0.0, %v1808
        %1810 = vmatmul.bf16.gmra.mxu0 %v1718
        %v1811 = vpop.f32.mrf.mxu0
        %v1812 = vadd.f32 0.0, %v1811
        %v1813 = vpop.f32.mrf.mxu0
        %v1814 = vadd.f32 0.0, %v1813
        %1815 = vmatmul.bf16.gmra.mxu0 %v1719
        %v1816 = vpop.f32.mrf.mxu0
        %v1817 = vadd.f32 0.0, %v1816
        %v1818 = vpop.f32.mrf.mxu0
        %v1819 = vadd.f32 0.0, %v1818
        %1820 = vmatmul.bf16.gmra.mxu0 %v1720
        %v1821 = vpop.f32.mrf.mxu0
        %v1822 = vadd.f32 0.0, %v1821
        %v1823 = vpop.f32.mrf.mxu0
        %v1824 = vadd.f32 0.0, %v1823
        %1825 = vdwg.mxu0
        %v1826 = vadd.f32 %v1576, %v1787
        %v1827 = vadd.f32 %v1577, %v1789
        %v1828 = vadd.f32 %v1578, %v1792
        %v1829 = vadd.f32 %v1579, %v1794
        %v1830 = vadd.f32 %v1580, %v1797
        %v1831 = vadd.f32 %v1581, %v1799
        %v1832 = vadd.f32 %v1582, %v1802
        %v1833 = vadd.f32 %v1583, %v1804
        %v1834 = vadd.f32 %v1584, %v1807
        %v1835 = vadd.f32 %v1585, %v1809
        %v1836 = vadd.f32 %v1586, %v1812
        %v1837 = vadd.f32 %v1587, %v1814
        %v1838 = vadd.f32 %v1588, %v1817
        %v1839 = vadd.f32 %v1589, %v1819
        %v1840 = vadd.f32 %v1590, %v1822
        %v1841 = vadd.f32 %v1591, %v1824
        %s1842 = sadd.s32 %s241, 2
        %s1843 = smul.u32 %s1842, 3
        %s1844 = smul.addr %s1843, 4
        %s1845 = scalar_lea.vmem %s234, %s1844
        %v1846 = vld [vmem:[%s1845] sm:$0xf]
        %v1847 = vld [vmem:[%s1845 + $0x4] sm:$0xf]
        %v1848 = vld [vmem:[%s1845 + $0xc] sm:$0xf]
        %v1849 = vld [vmem:[%s1845 + $0x10] sm:$0xf]
        %v1850 = vld [vmem:[%s1845 + $0x18] sm:$0xf]
        %v1851 = vld [vmem:[%s1845 + $0x1c] sm:$0xf]
        %v1852 = vld [vmem:[%s1845 + $0x24] sm:$0xf]
        %v1853 = vld [vmem:[%s1845 + $0x28] sm:$0xf]
        %v1854 = vld [vmem:[%s1845 + $0x30] sm:$0xf]
        %v1855 = vld [vmem:[%s1845 + $0x34] sm:$0xf]
        %v1856 = vld [vmem:[%s1845 + $0x3c] sm:$0xf]
        %v1857 = vld [vmem:[%s1845 + $0x40] sm:$0xf]
        %v1858 = vld [vmem:[%s1845 + $0x48] sm:$0xf]
        %v1859 = vld [vmem:[%s1845 + $0x4c] sm:$0xf]
        %v1860 = vld [vmem:[%s1845 + $0x54] sm:$0xf]
        %v1861 = vld [vmem:[%s1845 + $0x58] sm:$0xf]
        %s1862 = scalar_lea.vmem %s1, 384
        %v1863 = vld [vmem:[%s1862] sm:$0xf]
        %v1864 = vld [vmem:[%s1862 + $0x4] sm:$0xf]
        %v1865 = vld [vmem:[%s1862 + $0x8] sm:$0xf]
        %v1866 = vld [vmem:[%s1862 + $0xc] sm:$0xf]
        %v1867 = vld [vmem:[%s1862 + $0x10] sm:$0xf]
        %v1868 = vld [vmem:[%s1862 + $0x14] sm:$0xf]
        %v1869 = vld [vmem:[%s1862 + $0x18] sm:$0xf]
        %v1870 = vld [vmem:[%s1862 + $0x1c] sm:$0xf]
        %v1871 = vld [vmem:[%s1862 + $0x20] sm:$0xf]
        %v1872 = vld [vmem:[%s1862 + $0x24] sm:$0xf]
        %v1873 = vld [vmem:[%s1862 + $0x28] sm:$0xf]
        %v1874 = vld [vmem:[%s1862 + $0x2c] sm:$0xf]
        %v1875 = vld [vmem:[%s1862 + $0x30] sm:$0xf]
        %v1876 = vld [vmem:[%s1862 + $0x34] sm:$0xf]
        %v1877 = vld [vmem:[%s1862 + $0x38] sm:$0xf]
        %v1878 = vld [vmem:[%s1862 + $0x3c] sm:$0xf]
        %v1895 = vunpack.c.l.b16 %v1846
        %v1896 = vunpack.c.l.b16 %v1847
        %v1897 = vunpack.c.l.b16 %v1848
        %v1898 = vunpack.c.l.b16 %v1849
        %v1899 = vunpack.c.l.b16 %v1850
        %v1900 = vunpack.c.l.b16 %v1851
        %v1901 = vunpack.c.l.b16 %v1852
        %v1902 = vunpack.c.l.b16 %v1853
        %v1903 = vunpack.c.l.b16 %v1854
        %v1904 = vunpack.c.l.b16 %v1855
        %v1905 = vunpack.c.l.b16 %v1856
        %v1906 = vunpack.c.l.b16 %v1857
        %v1907 = vunpack.c.l.b16 %v1858
        %v1908 = vunpack.c.l.b16 %v1859
        %v1909 = vunpack.c.l.b16 %v1860
        %v1910 = vunpack.c.l.b16 %v1861
        %v1911 = vpack.c.b16 %v1896, %v1895
        %v1912 = vpack.c.b16 %v1898, %v1897
        %v1913 = vpack.c.b16 %v1900, %v1899
        %v1914 = vpack.c.b16 %v1902, %v1901
        %v1915 = vpack.c.b16 %v1904, %v1903
        %v1916 = vpack.c.b16 %v1906, %v1905
        %v1917 = vpack.c.b16 %v1908, %v1907
        %v1918 = vpack.c.b16 %v1910, %v1909
        %v1943 = vunpack.c.l.b16 %v1863
        %v1944 = vunpack.c.l.b16 %v1864
        %v1945 = vunpack.c.l.b16 %v1865
        %v1946 = vunpack.c.l.b16 %v1866
        %v1947 = vunpack.c.l.b16 %v1867
        %v1948 = vunpack.c.l.b16 %v1868
        %v1949 = vunpack.c.l.b16 %v1869
        %v1950 = vunpack.c.l.b16 %v1870
        %v1951 = vunpack.c.l.b16 %v1871
        %v1952 = vunpack.c.l.b16 %v1872
        %v1953 = vunpack.c.l.b16 %v1873
        %v1954 = vunpack.c.l.b16 %v1874
        %v1955 = vunpack.c.l.b16 %v1875
        %v1956 = vunpack.c.l.b16 %v1876
        %v1957 = vunpack.c.l.b16 %v1877
        %v1958 = vunpack.c.l.b16 %v1878
        %v1959 = vpack.c.b16 %v1944, %v1943
        %v1960 = vpack.c.b16 %v1946, %v1945
        %v1961 = vpack.c.b16 %v1948, %v1947
        %v1962 = vpack.c.b16 %v1950, %v1949
        %v1963 = vpack.c.b16 %v1952, %v1951
        %v1964 = vpack.c.b16 %v1954, %v1953
        %v1965 = vpack.c.b16 %v1956, %v1955
        %v1966 = vpack.c.b16 %v1958, %v1957
        %1975 = vmatpush.bf16.msra.mxu0 %v1966
        %1976 = vmatpush.bf16.msra.mxu0 %v1965
        %1977 = vmatpush.bf16.msra.mxu0 %v1964
        %1978 = vmatpush.bf16.msra.mxu0 %v1963
        %1979 = vmatpush.bf16.msra.mxu0 %v1962
        %1980 = vmatpush.bf16.msra.mxu0 %v1961
        %1981 = vmatpush.bf16.msra.mxu0 %v1960
        %1982 = vmatpush.bf16.msra.mxu0 %v1959
        %1983 = vmatmul.bf16.gmra.mxu0 %v1911
        %v1984 = vpop.f32.mrf.mxu0
        %v1985 = vadd.f32 0.0, %v1984
        %v1986 = vpop.f32.mrf.mxu0
        %v1987 = vadd.f32 0.0, %v1986
        %1988 = vmatmul.bf16.gmra.mxu0 %v1912
        %v1989 = vpop.f32.mrf.mxu0
        %v1990 = vadd.f32 0.0, %v1989
        %v1991 = vpop.f32.mrf.mxu0
        %v1992 = vadd.f32 0.0, %v1991
        %1993 = vmatmul.bf16.gmra.mxu0 %v1913
        %v1994 = vpop.f32.mrf.mxu0
        %v1995 = vadd.f32 0.0, %v1994
        %v1996 = vpop.f32.mrf.mxu0
        %v1997 = vadd.f32 0.0, %v1996
        %1998 = vmatmul.bf16.gmra.mxu0 %v1914
        %v1999 = vpop.f32.mrf.mxu0
        %v2000 = vadd.f32 0.0, %v1999
        %v2001 = vpop.f32.mrf.mxu0
        %v2002 = vadd.f32 0.0, %v2001
        %2003 = vmatmul.bf16.gmra.mxu0 %v1915
        %v2004 = vpop.f32.mrf.mxu0
        %v2005 = vadd.f32 0.0, %v2004
        %v2006 = vpop.f32.mrf.mxu0
        %v2007 = vadd.f32 0.0, %v2006
        %2008 = vmatmul.bf16.gmra.mxu0 %v1916
        %v2009 = vpop.f32.mrf.mxu0
        %v2010 = vadd.f32 0.0, %v2009
        %v2011 = vpop.f32.mrf.mxu0
        %v2012 = vadd.f32 0.0, %v2011
        %2013 = vmatmul.bf16.gmra.mxu0 %v1917
        %v2014 = vpop.f32.mrf.mxu0
        %v2015 = vadd.f32 0.0, %v2014
        %v2016 = vpop.f32.mrf.mxu0
        %v2017 = vadd.f32 0.0, %v2016
        %2018 = vmatmul.bf16.gmra.mxu0 %v1918
        %v2019 = vpop.f32.mrf.mxu0
        %v2020 = vadd.f32 0.0, %v2019
        %v2021 = vpop.f32.mrf.mxu0
        %v2022 = vadd.f32 0.0, %v2021
        %2023 = vdwg.mxu0
        %v2024 = vadd.f32 %v1826, %v1985
        %v2025 = vadd.f32 %v1827, %v1987
        %v2026 = vadd.f32 %v1828, %v1990
        %v2027 = vadd.f32 %v1829, %v1992
        %v2028 = vadd.f32 %v1830, %v1995
        %v2029 = vadd.f32 %v1831, %v1997
        %v2030 = vadd.f32 %v1832, %v2000
        %v2031 = vadd.f32 %v1833, %v2002
        %v2032 = vadd.f32 %v1834, %v2005
        %v2033 = vadd.f32 %v1835, %v2007
        %v2034 = vadd.f32 %v1836, %v2010
        %v2035 = vadd.f32 %v1837, %v2012
        %v2036 = vadd.f32 %v1838, %v2015
        %v2037 = vadd.f32 %v1839, %v2017
        %v2038 = vadd.f32 %v1840, %v2020
        %v2039 = vadd.f32 %v1841, %v2022
        %v2040 = vld [vmem:[%s1845] sm:$0xf]
        %v2041 = vld [vmem:[%s1845 + $0x4] sm:$0xf]
        %v2042 = vld [vmem:[%s1845 + $0x8] sm:$0x1]
        %v2043 = vld [vmem:[%s1845 + $0xc] sm:$0xf]
        %v2044 = vld [vmem:[%s1845 + $0x10] sm:$0xf]
        %v2045 = vld [vmem:[%s1845 + $0x14] sm:$0x1]
        %v2046 = vld [vmem:[%s1845 + $0x18] sm:$0xf]
        %v2047 = vld [vmem:[%s1845 + $0x1c] sm:$0xf]
        %v2048 = vld [vmem:[%s1845 + $0x20] sm:$0x1]
        %v2049 = vld [vmem:[%s1845 + $0x24] sm:$0xf]
        %v2050 = vld [vmem:[%s1845 + $0x28] sm:$0xf]
        %v2051 = vld [vmem:[%s1845 + $0x2c] sm:$0x1]
        %v2052 = vld [vmem:[%s1845 + $0x30] sm:$0xf]
        %v2053 = vld [vmem:[%s1845 + $0x34] sm:$0xf]
        %v2054 = vld [vmem:[%s1845 + $0x38] sm:$0x1]
        %v2055 = vld [vmem:[%s1845 + $0x3c] sm:$0xf]
        %v2056 = vld [vmem:[%s1845 + $0x40] sm:$0xf]
        %v2057 = vld [vmem:[%s1845 + $0x44] sm:$0x1]
        %v2058 = vld [vmem:[%s1845 + $0x48] sm:$0xf]
        %v2059 = vld [vmem:[%s1845 + $0x4c] sm:$0xf]
        %v2060 = vld [vmem:[%s1845 + $0x50] sm:$0x1]
        %v2061 = vld [vmem:[%s1845 + $0x54] sm:$0xf]
        %v2062 = vld [vmem:[%s1845 + $0x58] sm:$0xf]
        %v2063 = vld [vmem:[%s1845 + $0x5c] sm:$0x1]
        %v2065 = vshrl.u32 %v2040, 16
        %v2067 = vrot.slane %v2065, 4
        %v2068 = vshll.u32 %v2040, 16
        %v2070 = vrot.slane %v2068, 5
        %v2071 = vor.u32 %v2067, %v2070
        %v2072 = vrot.slane %v2071, 4
        %v2074 = vshll.u32 %v2041, 16
        %v2076 = vrot.slane %v2074, 5
        %v2077 = vsel %vm287, %v2072, %v2076
        %v2078 = vshrl.u32 %v2041, 16
        %v2080 = vrot.slane %v2078, 4
        %v2081 = vor.u32 %v2080, %v2076
        %v2082 = vrot.slane %v2081, 4
        %v2084 = vshll.u32 %v2042, 16
        %v2086 = vrot.slane %v2084, 5
        %v2087 = vsel %vm287, %v2082, %v2086
        %v2089 = vshrl.u32 %v2043, 16
        %v2091 = vrot.slane %v2089, 4
        %v2092 = vshll.u32 %v2043, 16
        %v2094 = vrot.slane %v2092, 5
        %v2095 = vor.u32 %v2091, %v2094
        %v2096 = vrot.slane %v2095, 4
        %v2098 = vshll.u32 %v2044, 16
        %v2100 = vrot.slane %v2098, 5
        %v2101 = vsel %vm287, %v2096, %v2100
        %v2102 = vshrl.u32 %v2044, 16
        %v2104 = vrot.slane %v2102, 4
        %v2105 = vor.u32 %v2104, %v2100
        %v2106 = vrot.slane %v2105, 4
        %v2108 = vshll.u32 %v2045, 16
        %v2110 = vrot.slane %v2108, 5
        %v2111 = vsel %vm287, %v2106, %v2110
        %v2113 = vshrl.u32 %v2046, 16
        %v2115 = vrot.slane %v2113, 4
        %v2116 = vshll.u32 %v2046, 16
        %v2118 = vrot.slane %v2116, 5
        %v2119 = vor.u32 %v2115, %v2118
        %v2120 = vrot.slane %v2119, 4
        %v2122 = vshll.u32 %v2047, 16
        %v2124 = vrot.slane %v2122, 5
        %v2125 = vsel %vm287, %v2120, %v2124
        %v2126 = vshrl.u32 %v2047, 16
        %v2128 = vrot.slane %v2126, 4
        %v2129 = vor.u32 %v2128, %v2124
        %v2130 = vrot.slane %v2129, 4
        %v2132 = vshll.u32 %v2048, 16
        %v2134 = vrot.slane %v2132, 5
        %v2135 = vsel %vm287, %v2130, %v2134
        %v2137 = vshrl.u32 %v2049, 16
        %v2139 = vrot.slane %v2137, 4
        %v2140 = vshll.u32 %v2049, 16
        %v2142 = vrot.slane %v2140, 5
        %v2143 = vor.u32 %v2139, %v2142
        %v2144 = vrot.slane %v2143, 4
        %v2146 = vshll.u32 %v2050, 16
        %v2148 = vrot.slane %v2146, 5
        %v2149 = vsel %vm287, %v2144, %v2148
        %v2150 = vshrl.u32 %v2050, 16
        %v2152 = vrot.slane %v2150, 4
        %v2153 = vor.u32 %v2152, %v2148
        %v2154 = vrot.slane %v2153, 4
        %v2156 = vshll.u32 %v2051, 16
        %v2158 = vrot.slane %v2156, 5
        %v2159 = vsel %vm287, %v2154, %v2158
        %v2161 = vshrl.u32 %v2052, 16
        %v2163 = vrot.slane %v2161, 4
        %v2164 = vshll.u32 %v2052, 16
        %v2166 = vrot.slane %v2164, 5
        %v2167 = vor.u32 %v2163, %v2166
        %v2168 = vrot.slane %v2167, 4
        %v2170 = vshll.u32 %v2053, 16
        %v2172 = vrot.slane %v2170, 5
        %v2173 = vsel %vm287, %v2168, %v2172
        %v2174 = vshrl.u32 %v2053, 16
        %v2176 = vrot.slane %v2174, 4
        %v2177 = vor.u32 %v2176, %v2172
        %v2178 = vrot.slane %v2177, 4
        %v2180 = vshll.u32 %v2054, 16
        %v2182 = vrot.slane %v2180, 5
        %v2183 = vsel %vm287, %v2178, %v2182
        %v2185 = vshrl.u32 %v2055, 16
        %v2187 = vrot.slane %v2185, 4
        %v2188 = vshll.u32 %v2055, 16
        %v2190 = vrot.slane %v2188, 5
        %v2191 = vor.u32 %v2187, %v2190
        %v2192 = vrot.slane %v2191, 4
        %v2194 = vshll.u32 %v2056, 16
        %v2196 = vrot.slane %v2194, 5
        %v2197 = vsel %vm287, %v2192, %v2196
        %v2198 = vshrl.u32 %v2056, 16
        %v2200 = vrot.slane %v2198, 4
        %v2201 = vor.u32 %v2200, %v2196
        %v2202 = vrot.slane %v2201, 4
        %v2204 = vshll.u32 %v2057, 16
        %v2206 = vrot.slane %v2204, 5
        %v2207 = vsel %vm287, %v2202, %v2206
        %v2209 = vshrl.u32 %v2058, 16
        %v2211 = vrot.slane %v2209, 4
        %v2212 = vshll.u32 %v2058, 16
        %v2214 = vrot.slane %v2212, 5
        %v2215 = vor.u32 %v2211, %v2214
        %v2216 = vrot.slane %v2215, 4
        %v2218 = vshll.u32 %v2059, 16
        %v2220 = vrot.slane %v2218, 5
        %v2221 = vsel %vm287, %v2216, %v2220
        %v2222 = vshrl.u32 %v2059, 16
        %v2224 = vrot.slane %v2222, 4
        %v2225 = vor.u32 %v2224, %v2220
        %v2226 = vrot.slane %v2225, 4
        %v2228 = vshll.u32 %v2060, 16
        %v2230 = vrot.slane %v2228, 5
        %v2231 = vsel %vm287, %v2226, %v2230
        %v2233 = vshrl.u32 %v2061, 16
        %v2235 = vrot.slane %v2233, 4
        %v2236 = vshll.u32 %v2061, 16
        %v2238 = vrot.slane %v2236, 5
        %v2239 = vor.u32 %v2235, %v2238
        %v2240 = vrot.slane %v2239, 4
        %v2242 = vshll.u32 %v2062, 16
        %v2244 = vrot.slane %v2242, 5
        %v2245 = vsel %vm287, %v2240, %v2244
        %v2246 = vshrl.u32 %v2062, 16
        %v2248 = vrot.slane %v2246, 4
        %v2249 = vor.u32 %v2248, %v2244
        %v2250 = vrot.slane %v2249, 4
        %v2252 = vshll.u32 %v2063, 16
        %v2254 = vrot.slane %v2252, 5
        %v2255 = vsel %vm287, %v2250, %v2254
        %s2256 = scalar_lea.vmem %s1, 448
        %v2257 = vld [vmem:[%s2256] sm:$0xf]
        %v2258 = vld [vmem:[%s2256 + $0x4] sm:$0xf]
        %v2259 = vld [vmem:[%s2256 + $0x8] sm:$0xf]
        %v2260 = vld [vmem:[%s2256 + $0xc] sm:$0xf]
        %v2261 = vld [vmem:[%s2256 + $0x10] sm:$0xf]
        %v2262 = vld [vmem:[%s2256 + $0x14] sm:$0xf]
        %v2263 = vld [vmem:[%s2256 + $0x18] sm:$0xf]
        %v2264 = vld [vmem:[%s2256 + $0x1c] sm:$0xf]
        %v2265 = vld [vmem:[%s2256 + $0x20] sm:$0xf]
        %v2266 = vld [vmem:[%s2256 + $0x24] sm:$0xf]
        %v2267 = vld [vmem:[%s2256 + $0x28] sm:$0xf]
        %v2268 = vld [vmem:[%s2256 + $0x2c] sm:$0xf]
        %v2269 = vld [vmem:[%s2256 + $0x30] sm:$0xf]
        %v2270 = vld [vmem:[%s2256 + $0x34] sm:$0xf]
        %v2271 = vld [vmem:[%s2256 + $0x38] sm:$0xf]
        %v2272 = vld [vmem:[%s2256 + $0x3c] sm:$0xf]
        %v2273 = vunpack.c.l.b16 %v2077
        %v2274 = vunpack.c.l.b16 %v2087
        %v2275 = vunpack.c.l.b16 %v2101
        %v2276 = vunpack.c.l.b16 %v2111
        %v2277 = vunpack.c.l.b16 %v2125
        %v2278 = vunpack.c.l.b16 %v2135
        %v2279 = vunpack.c.l.b16 %v2149
        %v2280 = vunpack.c.l.b16 %v2159
        %v2281 = vunpack.c.l.b16 %v2173
        %v2282 = vunpack.c.l.b16 %v2183
        %v2283 = vunpack.c.l.b16 %v2197
        %v2284 = vunpack.c.l.b16 %v2207
        %v2285 = vunpack.c.l.b16 %v2221
        %v2286 = vunpack.c.l.b16 %v2231
        %v2287 = vunpack.c.l.b16 %v2245
        %v2288 = vunpack.c.l.b16 %v2255
        %v2289 = vpack.c.b16 %v2274, %v2273
        %v2290 = vpack.c.b16 %v2276, %v2275
        %v2291 = vpack.c.b16 %v2278, %v2277
        %v2292 = vpack.c.b16 %v2280, %v2279
        %v2293 = vpack.c.b16 %v2282, %v2281
        %v2294 = vpack.c.b16 %v2284, %v2283
        %v2295 = vpack.c.b16 %v2286, %v2285
        %v2296 = vpack.c.b16 %v2288, %v2287
        %v2321 = vunpack.c.l.b16 %v2257
        %v2322 = vunpack.c.l.b16 %v2258
        %v2323 = vunpack.c.l.b16 %v2259
        %v2324 = vunpack.c.l.b16 %v2260
        %v2325 = vunpack.c.l.b16 %v2261
        %v2326 = vunpack.c.l.b16 %v2262
        %v2327 = vunpack.c.l.b16 %v2263
        %v2328 = vunpack.c.l.b16 %v2264
        %v2329 = vunpack.c.l.b16 %v2265
        %v2330 = vunpack.c.l.b16 %v2266
        %v2331 = vunpack.c.l.b16 %v2267
        %v2332 = vunpack.c.l.b16 %v2268
        %v2333 = vunpack.c.l.b16 %v2269
        %v2334 = vunpack.c.l.b16 %v2270
        %v2335 = vunpack.c.l.b16 %v2271
        %v2336 = vunpack.c.l.b16 %v2272
        %v2337 = vpack.c.b16 %v2322, %v2321
        %v2338 = vpack.c.b16 %v2324, %v2323
        %v2339 = vpack.c.b16 %v2326, %v2325
        %v2340 = vpack.c.b16 %v2328, %v2327
        %v2341 = vpack.c.b16 %v2330, %v2329
        %v2342 = vpack.c.b16 %v2332, %v2331
        %v2343 = vpack.c.b16 %v2334, %v2333
        %v2344 = vpack.c.b16 %v2336, %v2335
        %2353 = vmatpush.bf16.msra.mxu0 %v2344
        %2354 = vmatpush.bf16.msra.mxu0 %v2343
        %2355 = vmatpush.bf16.msra.mxu0 %v2342
        %2356 = vmatpush.bf16.msra.mxu0 %v2341
        %2357 = vmatpush.bf16.msra.mxu0 %v2340
        %2358 = vmatpush.bf16.msra.mxu0 %v2339
        %2359 = vmatpush.bf16.msra.mxu0 %v2338
        %2360 = vmatpush.bf16.msra.mxu0 %v2337
        %2361 = vmatmul.bf16.gmra.mxu0 %v2289
        %v2362 = vpop.f32.mrf.mxu0
        %v2363 = vadd.f32 0.0, %v2362
        %v2364 = vpop.f32.mrf.mxu0
        %v2365 = vadd.f32 0.0, %v2364
        %2366 = vmatmul.bf16.gmra.mxu0 %v2290
        %v2367 = vpop.f32.mrf.mxu0
        %v2368 = vadd.f32 0.0, %v2367
        %v2369 = vpop.f32.mrf.mxu0
        %v2370 = vadd.f32 0.0, %v2369
        %2371 = vmatmul.bf16.gmra.mxu0 %v2291
        %v2372 = vpop.f32.mrf.mxu0
        %v2373 = vadd.f32 0.0, %v2372
        %v2374 = vpop.f32.mrf.mxu0
        %v2375 = vadd.f32 0.0, %v2374
        %2376 = vmatmul.bf16.gmra.mxu0 %v2292
        %v2377 = vpop.f32.mrf.mxu0
        %v2378 = vadd.f32 0.0, %v2377
        %v2379 = vpop.f32.mrf.mxu0
        %v2380 = vadd.f32 0.0, %v2379
        %2381 = vmatmul.bf16.gmra.mxu0 %v2293
        %v2382 = vpop.f32.mrf.mxu0
        %v2383 = vadd.f32 0.0, %v2382
        %v2384 = vpop.f32.mrf.mxu0
        %v2385 = vadd.f32 0.0, %v2384
        %2386 = vmatmul.bf16.gmra.mxu0 %v2294
        %v2387 = vpop.f32.mrf.mxu0
        %v2388 = vadd.f32 0.0, %v2387
        %v2389 = vpop.f32.mrf.mxu0
        %v2390 = vadd.f32 0.0, %v2389
        %2391 = vmatmul.bf16.gmra.mxu0 %v2295
        %v2392 = vpop.f32.mrf.mxu0
        %v2393 = vadd.f32 0.0, %v2392
        %v2394 = vpop.f32.mrf.mxu0
        %v2395 = vadd.f32 0.0, %v2394
        %2396 = vmatmul.bf16.gmra.mxu0 %v2296
        %v2397 = vpop.f32.mrf.mxu0
        %v2398 = vadd.f32 0.0, %v2397
        %v2399 = vpop.f32.mrf.mxu0
        %v2400 = vadd.f32 0.0, %v2399
        %2401 = vdwg.mxu0
        %v2402 = vadd.f32 %v2024, %v2363
        %v2403 = vadd.f32 %v2025, %v2365
        %v2404 = vadd.f32 %v2026, %v2368
        %v2405 = vadd.f32 %v2027, %v2370
        %v2406 = vadd.f32 %v2028, %v2373
        %v2407 = vadd.f32 %v2029, %v2375
        %v2408 = vadd.f32 %v2030, %v2378
        %v2409 = vadd.f32 %v2031, %v2380
        %v2410 = vadd.f32 %v2032, %v2383
        %v2411 = vadd.f32 %v2033, %v2385
        %v2412 = vadd.f32 %v2034, %v2388
        %v2413 = vadd.f32 %v2035, %v2390
        %v2414 = vadd.f32 %v2036, %v2393
        %v2415 = vadd.f32 %v2037, %v2395
        %v2416 = vadd.f32 %v2038, %v2398
        %v2417 = vadd.f32 %v2039, %v2400
        %v2418 = vld [vmem:[%s1845] sm:$0xe]
        %v2419 = vld [vmem:[%s1845 + $0xc] sm:$0xe]
        %v2420 = vld [vmem:[%s1845 + $0x18] sm:$0xe]
        %v2421 = vld [vmem:[%s1845 + $0x24] sm:$0xe]
        %v2422 = vld [vmem:[%s1845 + $0x30] sm:$0xe]
        %v2423 = vld [vmem:[%s1845 + $0x3c] sm:$0xe]
        %v2424 = vld [vmem:[%s1845 + $0x48] sm:$0xe]
        %v2425 = vld [vmem:[%s1845 + $0x54] sm:$0xe]
        %v2450 = vrot.slane %v2418, 5
        %v2451 = vrot.slane %v2450, 4
        %v2452 = vrot.slane %v2041, 5
        %v2453 = vsel %vm797, %v2451, %v2452
        %v2454 = vrot.slane %v2452, 4
        %v2455 = vrot.slane %v2042, 5
        %v2456 = vsel %vm797, %v2454, %v2455
        %v2457 = vrot.slane %v2419, 5
        %v2458 = vrot.slane %v2457, 4
        %v2459 = vrot.slane %v2044, 5
        %v2460 = vsel %vm797, %v2458, %v2459
        %v2461 = vrot.slane %v2459, 4
        %v2462 = vrot.slane %v2045, 5
        %v2463 = vsel %vm797, %v2461, %v2462
        %v2464 = vrot.slane %v2420, 5
        %v2465 = vrot.slane %v2464, 4
        %v2466 = vrot.slane %v2047, 5
        %v2467 = vsel %vm797, %v2465, %v2466
        %v2468 = vrot.slane %v2466, 4
        %v2469 = vrot.slane %v2048, 5
        %v2470 = vsel %vm797, %v2468, %v2469
        %v2471 = vrot.slane %v2421, 5
        %v2472 = vrot.slane %v2471, 4
        %v2473 = vrot.slane %v2050, 5
        %v2474 = vsel %vm797, %v2472, %v2473
        %v2475 = vrot.slane %v2473, 4
        %v2476 = vrot.slane %v2051, 5
        %v2477 = vsel %vm797, %v2475, %v2476
        %v2478 = vrot.slane %v2422, 5
        %v2479 = vrot.slane %v2478, 4
        %v2480 = vrot.slane %v2053, 5
        %v2481 = vsel %vm797, %v2479, %v2480
        %v2482 = vrot.slane %v2480, 4
        %v2483 = vrot.slane %v2054, 5
        %v2484 = vsel %vm797, %v2482, %v2483
        %v2485 = vrot.slane %v2423, 5
        %v2486 = vrot.slane %v2485, 4
        %v2487 = vrot.slane %v2056, 5
        %v2488 = vsel %vm797, %v2486, %v2487
        %v2489 = vrot.slane %v2487, 4
        %v2490 = vrot.slane %v2057, 5
        %v2491 = vsel %vm797, %v2489, %v2490
        %v2492 = vrot.slane %v2424, 5
        %v2493 = vrot.slane %v2492, 4
        %v2494 = vrot.slane %v2059, 5
        %v2495 = vsel %vm797, %v2493, %v2494
        %v2496 = vrot.slane %v2494, 4
        %v2497 = vrot.slane %v2060, 5
        %v2498 = vsel %vm797, %v2496, %v2497
        %v2499 = vrot.slane %v2425, 5
        %v2500 = vrot.slane %v2499, 4
        %v2501 = vrot.slane %v2062, 5
        %v2502 = vsel %vm797, %v2500, %v2501
        %v2503 = vrot.slane %v2501, 4
        %v2504 = vrot.slane %v2063, 5
        %v2505 = vsel %vm797, %v2503, %v2504
        %s2506 = scalar_lea.vmem %s1, 512
        %v2507 = vld [vmem:[%s2506] sm:$0xf]
        %v2508 = vld [vmem:[%s2506 + $0x4] sm:$0xf]
        %v2509 = vld [vmem:[%s2506 + $0x8] sm:$0xf]
        %v2510 = vld [vmem:[%s2506 + $0xc] sm:$0xf]
        %v2511 = vld [vmem:[%s2506 + $0x10] sm:$0xf]
        %v2512 = vld [vmem:[%s2506 + $0x14] sm:$0xf]
        %v2513 = vld [vmem:[%s2506 + $0x18] sm:$0xf]
        %v2514 = vld [vmem:[%s2506 + $0x1c] sm:$0xf]
        %v2515 = vld [vmem:[%s2506 + $0x20] sm:$0xf]
        %v2516 = vld [vmem:[%s2506 + $0x24] sm:$0xf]
        %v2517 = vld [vmem:[%s2506 + $0x28] sm:$0xf]
        %v2518 = vld [vmem:[%s2506 + $0x2c] sm:$0xf]
        %v2519 = vld [vmem:[%s2506 + $0x30] sm:$0xf]
        %v2520 = vld [vmem:[%s2506 + $0x34] sm:$0xf]
        %v2521 = vld [vmem:[%s2506 + $0x38] sm:$0xf]
        %v2522 = vld [vmem:[%s2506 + $0x3c] sm:$0xf]
        %v2523 = vunpack.c.l.b16 %v2453
        %v2524 = vunpack.c.l.b16 %v2456
        %v2525 = vunpack.c.l.b16 %v2460
        %v2526 = vunpack.c.l.b16 %v2463
        %v2527 = vunpack.c.l.b16 %v2467
        %v2528 = vunpack.c.l.b16 %v2470
        %v2529 = vunpack.c.l.b16 %v2474
        %v2530 = vunpack.c.l.b16 %v2477
        %v2531 = vunpack.c.l.b16 %v2481
        %v2532 = vunpack.c.l.b16 %v2484
        %v2533 = vunpack.c.l.b16 %v2488
        %v2534 = vunpack.c.l.b16 %v2491
        %v2535 = vunpack.c.l.b16 %v2495
        %v2536 = vunpack.c.l.b16 %v2498
        %v2537 = vunpack.c.l.b16 %v2502
        %v2538 = vunpack.c.l.b16 %v2505
        %v2539 = vpack.c.b16 %v2524, %v2523
        %v2540 = vpack.c.b16 %v2526, %v2525
        %v2541 = vpack.c.b16 %v2528, %v2527
        %v2542 = vpack.c.b16 %v2530, %v2529
        %v2543 = vpack.c.b16 %v2532, %v2531
        %v2544 = vpack.c.b16 %v2534, %v2533
        %v2545 = vpack.c.b16 %v2536, %v2535
        %v2546 = vpack.c.b16 %v2538, %v2537
        %v2571 = vunpack.c.l.b16 %v2507
        %v2572 = vunpack.c.l.b16 %v2508
        %v2573 = vunpack.c.l.b16 %v2509
        %v2574 = vunpack.c.l.b16 %v2510
        %v2575 = vunpack.c.l.b16 %v2511
        %v2576 = vunpack.c.l.b16 %v2512
        %v2577 = vunpack.c.l.b16 %v2513
        %v2578 = vunpack.c.l.b16 %v2514
        %v2579 = vunpack.c.l.b16 %v2515
        %v2580 = vunpack.c.l.b16 %v2516
        %v2581 = vunpack.c.l.b16 %v2517
        %v2582 = vunpack.c.l.b16 %v2518
        %v2583 = vunpack.c.l.b16 %v2519
        %v2584 = vunpack.c.l.b16 %v2520
        %v2585 = vunpack.c.l.b16 %v2521
        %v2586 = vunpack.c.l.b16 %v2522
        %v2587 = vpack.c.b16 %v2572, %v2571
        %v2588 = vpack.c.b16 %v2574, %v2573
        %v2589 = vpack.c.b16 %v2576, %v2575
        %v2590 = vpack.c.b16 %v2578, %v2577
        %v2591 = vpack.c.b16 %v2580, %v2579
        %v2592 = vpack.c.b16 %v2582, %v2581
        %v2593 = vpack.c.b16 %v2584, %v2583
        %v2594 = vpack.c.b16 %v2586, %v2585
        %2603 = vmatpush.bf16.msra.mxu0 %v2594
        %2604 = vmatpush.bf16.msra.mxu0 %v2593
        %2605 = vmatpush.bf16.msra.mxu0 %v2592
        %2606 = vmatpush.bf16.msra.mxu0 %v2591
        %2607 = vmatpush.bf16.msra.mxu0 %v2590
        %2608 = vmatpush.bf16.msra.mxu0 %v2589
        %2609 = vmatpush.bf16.msra.mxu0 %v2588
        %2610 = vmatpush.bf16.msra.mxu0 %v2587
        %2611 = vmatmul.bf16.gmra.mxu0 %v2539
        %v2612 = vpop.f32.mrf.mxu0
        %v2613 = vadd.f32 0.0, %v2612
        %v2614 = vpop.f32.mrf.mxu0
        %v2615 = vadd.f32 0.0, %v2614
        %2616 = vmatmul.bf16.gmra.mxu0 %v2540
        %v2617 = vpop.f32.mrf.mxu0
        %v2618 = vadd.f32 0.0, %v2617
        %v2619 = vpop.f32.mrf.mxu0
        %v2620 = vadd.f32 0.0, %v2619
        %2621 = vmatmul.bf16.gmra.mxu0 %v2541
        %v2622 = vpop.f32.mrf.mxu0
        %v2623 = vadd.f32 0.0, %v2622
        %v2624 = vpop.f32.mrf.mxu0
        %v2625 = vadd.f32 0.0, %v2624
        %2626 = vmatmul.bf16.gmra.mxu0 %v2542
        %v2627 = vpop.f32.mrf.mxu0
        %v2628 = vadd.f32 0.0, %v2627
        %v2629 = vpop.f32.mrf.mxu0
        %v2630 = vadd.f32 0.0, %v2629
        %2631 = vmatmul.bf16.gmra.mxu0 %v2543
        %v2632 = vpop.f32.mrf.mxu0
        %v2633 = vadd.f32 0.0, %v2632
        %v2634 = vpop.f32.mrf.mxu0
        %v2635 = vadd.f32 0.0, %v2634
        %2636 = vmatmul.bf16.gmra.mxu0 %v2544
        %v2637 = vpop.f32.mrf.mxu0
        %v2638 = vadd.f32 0.0, %v2637
        %v2639 = vpop.f32.mrf.mxu0
        %v2640 = vadd.f32 0.0, %v2639
        %2641 = vmatmul.bf16.gmra.mxu0 %v2545
        %v2642 = vpop.f32.mrf.mxu0
        %v2643 = vadd.f32 0.0, %v2642
        %v2644 = vpop.f32.mrf.mxu0
        %v2645 = vadd.f32 0.0, %v2644
        %2646 = vmatmul.bf16.gmra.mxu0 %v2546
        %v2647 = vpop.f32.mrf.mxu0
        %v2648 = vadd.f32 0.0, %v2647
        %v2649 = vpop.f32.mrf.mxu0
        %v2650 = vadd.f32 0.0, %v2649
        %2651 = vdwg.mxu0
        %v2652 = vadd.f32 %v2402, %v2613
        %v2653 = vadd.f32 %v2403, %v2615
        %v2654 = vadd.f32 %v2404, %v2618
        %v2655 = vadd.f32 %v2405, %v2620
        %v2656 = vadd.f32 %v2406, %v2623
        %v2657 = vadd.f32 %v2407, %v2625
        %v2658 = vadd.f32 %v2408, %v2628
        %v2659 = vadd.f32 %v2409, %v2630
        %v2660 = vadd.f32 %v2410, %v2633
        %v2661 = vadd.f32 %v2411, %v2635
        %v2662 = vadd.f32 %v2412, %v2638
        %v2663 = vadd.f32 %v2413, %v2640
        %v2664 = vadd.f32 %v2414, %v2643
        %v2665 = vadd.f32 %v2415, %v2645
        %v2666 = vadd.f32 %v2416, %v2648
        %v2667 = vadd.f32 %v2417, %v2650
        %v2668 = vld [vmem:[%s2] sm:$0x1]
        %v2670 = vperm.slane %v2668, 0
        %v2672 = vadd.f32 %v2652, %v2670
        %v2673 = vadd.f32 %v2653, %v2670
        %v2674 = vadd.f32 %v2654, %v2670
        %v2675 = vadd.f32 %v2655, %v2670
        %v2676 = vadd.f32 %v2656, %v2670
        %v2677 = vadd.f32 %v2657, %v2670
        %v2678 = vadd.f32 %v2658, %v2670
        %v2679 = vadd.f32 %v2659, %v2670
        %v2680 = vadd.f32 %v2660, %v2670
        %v2681 = vadd.f32 %v2661, %v2670
        %v2682 = vadd.f32 %v2662, %v2670
        %v2683 = vadd.f32 %v2663, %v2670
        %v2684 = vadd.f32 %v2664, %v2670
        %v2685 = vadd.f32 %v2665, %v2670
        %v2686 = vadd.f32 %v2666, %v2670
        %v2687 = vadd.f32 %v2667, %v2670
        %v2688 = vld [vmem:[#allocation2] sm:$0x1]
        %v2689 = vadd.f32 %v2672, %v2673
        %v2690 = vadd.f32 %v2689, %v2674
        %v2691 = vadd.f32 %v2690, %v2675
        %v2692 = vadd.f32 %v2691, %v2676
        %v2693 = vadd.f32 %v2692, %v2677
        %v2694 = vadd.f32 %v2693, %v2678
        %v2695 = vadd.f32 %v2694, %v2679
        %v2696 = vadd.f32 %v2695, %v2680
        %v2697 = vadd.f32 %v2696, %v2681
        %v2698 = vadd.f32 %v2697, %v2682
        %v2699 = vadd.f32 %v2698, %v2683
        %v2700 = vadd.f32 %v2699, %v2684
        %v2701 = vadd.f32 %v2700, %v2685
        %v2702 = vadd.f32 %v2701, %v2686
        %v2703 = vadd.f32 %v2702, %v2687
        %v2704 = vrot.slane %v2703, 4
        %v2705 = vadd.f32 %v2703, %v2704
        %v2706 = vrot.slane %v2705, 2
        %v2707 = vadd.f32 %v2705, %v2706
        %v2708 = vrot.slane %v2707, 1
        %v2709 = vadd.f32 %v2707, %v2708
        %v2710 = vadd.f32 %v2688, %v2709
        %2711 = vst [vmem:[#allocation2] sm:$0x1] %v2710
        %v2712 = vld [vmem:[#allocation3] sm:$0x1]
        %v2713 = vmul.f32 %v2672, %v2672
        %v2714 = vmul.f32 %v2673, %v2673
        %v2715 = vmul.f32 %v2674, %v2674
        %v2716 = vmul.f32 %v2675, %v2675
        %v2717 = vmul.f32 %v2676, %v2676
        %v2718 = vmul.f32 %v2677, %v2677
        %v2719 = vmul.f32 %v2678, %v2678
        %v2720 = vmul.f32 %v2679, %v2679
        %v2721 = vmul.f32 %v2680, %v2680
        %v2722 = vmul.f32 %v2681, %v2681
        %v2723 = vmul.f32 %v2682, %v2682
        %v2724 = vmul.f32 %v2683, %v2683
        %v2725 = vmul.f32 %v2684, %v2684
        %v2726 = vmul.f32 %v2685, %v2685
        %v2727 = vmul.f32 %v2686, %v2686
        %v2728 = vmul.f32 %v2687, %v2687
        %v2729 = vadd.f32 %v2713, %v2714
        %v2730 = vadd.f32 %v2729, %v2715
        %v2731 = vadd.f32 %v2730, %v2716
        %v2732 = vadd.f32 %v2731, %v2717
        %v2733 = vadd.f32 %v2732, %v2718
        %v2734 = vadd.f32 %v2733, %v2719
        %v2735 = vadd.f32 %v2734, %v2720
        %v2736 = vadd.f32 %v2735, %v2721
        %v2737 = vadd.f32 %v2736, %v2722
        %v2738 = vadd.f32 %v2737, %v2723
        %v2739 = vadd.f32 %v2738, %v2724
        %v2740 = vadd.f32 %v2739, %v2725
        %v2741 = vadd.f32 %v2740, %v2726
        %v2742 = vadd.f32 %v2741, %v2727
        %v2743 = vadd.f32 %v2742, %v2728
        %v2744 = vrot.slane %v2743, 4
        %v2745 = vadd.f32 %v2743, %v2744
        %v2746 = vrot.slane %v2745, 2
        %v2747 = vadd.f32 %v2745, %v2746
        %v2748 = vrot.slane %v2747, 1
        %v2749 = vadd.f32 %v2747, %v2748
        %v2750 = vadd.f32 %v2712, %v2749
        %2751 = vst [vmem:[#allocation3] sm:$0x1] %v2750
        %s2752 = smul.u32 %s241, 16
        %s2753 = scalar_lea.vmem %s229, %s2752 [#allocation4]
        %2754 = vst [vmem:[%s2753] sm:$0xff] %v2672
        %2755 = vst [vmem:[%s2753 + $0x8] sm:$0xff] %v2673
        %2756 = vst [vmem:[%s2753 + $0x10] sm:$0xff] %v2674
        %2757 = vst [vmem:[%s2753 + $0x18] sm:$0xff] %v2675
        %2758 = vst [vmem:[%s2753 + $0x20] sm:$0xff] %v2676
        %2759 = vst [vmem:[%s2753 + $0x28] sm:$0xff] %v2677
        %2760 = vst [vmem:[%s2753 + $0x30] sm:$0xff] %v2678
        %2761 = vst [vmem:[%s2753 + $0x38] sm:$0xff] %v2679
        %2762 = vst [vmem:[%s2753 + $0x40] sm:$0xff] %v2680
        %2763 = vst [vmem:[%s2753 + $0x48] sm:$0xff] %v2681
        %2764 = vst [vmem:[%s2753 + $0x50] sm:$0xff] %v2682
        %2765 = vst [vmem:[%s2753 + $0x58] sm:$0xff] %v2683
        %2766 = vst [vmem:[%s2753 + $0x60] sm:$0xff] %v2684
        %2767 = vst [vmem:[%s2753 + $0x68] sm:$0xff] %v2685
        %2768 = vst [vmem:[%s2753 + $0x70] sm:$0xff] %v2686
        %2769 = vst [vmem:[%s2753 + $0x78] sm:$0xff] %v2687
        %p2770 = scmp.eq.s32.totalorder %s24, 1
        // Predicated region
        $region45: #{tpu_custom_call.1} parent=39 // pred_check
          %p2771 = pneg %p2770
        $region46: #{tpu_custom_call.1} parent=39 // pred_check_branch
          %2773 = sbr.rel (%p2771) target = $region48
        $region47: #{tpu_custom_call.1} parent=39 // pred_region
          %v2774 = vld [vmem:[#allocation2] sm:$0x1]
          %v2775 = vmul.f32 %v2774, 0.00390625
          %v2776 = vld [vmem:[#allocation3] sm:$0x1]
          %v2777 = vmul.f32 %v2776, 0.00390625
          %v2778 = vmul.f32 %v2775, %v2775
          %v2779 = vsub.f32 %v2777, %v2778
          %v2780 = vmax.f32 %v2779, 0.0
          %v2781 = vld [vmem:[%s3] sm:$0x1]
          %v2782 = vadd.f32 %v2780, 1e-05
          %v2783 = vrsqrt.pop %v2782
          %v2784 = vmul.f32 %v2783, %v2782
          %v2785 = vmul.f32 %v2784, %v2783
          %v2786 = vmul.f32 0.5, %v2785
          %v2787 = vsub.f32 1.5, %v2786
          %v2788 = vmul.f32 %v2783, %v2787
          %vm2789 = vweird.f32 %v2782
          %vm2790 = vweird.f32 %v2783
          %vm2791 = vmor %vm2789, %vm2790
          %v2792 = vsel %vm2791, %v2783, %v2788
          %v2793 = vmul.f32 %v2781, %v2792
          %v2794 = vld [vmem:[%s4] sm:$0x1]
          %v2795 = vmul.f32 %v2775, %v2793
          %v2796 = vsub.f32 %v2794, %v2795
          %v2797 = vld [vmem:[%s229] sm:$0xff]
          %v2798 = vld [vmem:[%s229 + $0x8] sm:$0xff]
          %v2799 = vld [vmem:[%s229 + $0x10] sm:$0xff]
          %v2800 = vld [vmem:[%s229 + $0x18] sm:$0xff]
          %v2801 = vld [vmem:[%s229 + $0x20] sm:$0xff]
          %v2802 = vld [vmem:[%s229 + $0x28] sm:$0xff]
          %v2803 = vld [vmem:[%s229 + $0x30] sm:$0xff]
          %v2804 = vld [vmem:[%s229 + $0x38] sm:$0xff]
          %v2805 = vld [vmem:[%s229 + $0x40] sm:$0xff]
          %v2806 = vld [vmem:[%s229 + $0x48] sm:$0xff]
          %v2807 = vld [vmem:[%s229 + $0x50] sm:$0xff]
          %v2808 = vld [vmem:[%s229 + $0x58] sm:$0xff]
          %v2809 = vld [vmem:[%s229 + $0x60] sm:$0xff]
          %v2810 = vld [vmem:[%s229 + $0x68] sm:$0xff]
          %v2811 = vld [vmem:[%s229 + $0x70] sm:$0xff]
          %v2812 = vld [vmem:[%s229 + $0x78] sm:$0xff]
          %v2813 = vld [vmem:[%s229 + $0x80] sm:$0xff]
          %v2814 = vld [vmem:[%s229 + $0x88] sm:$0xff]
          %v2815 = vld [vmem:[%s229 + $0x90] sm:$0xff]
          %v2816 = vld [vmem:[%s229 + $0x98] sm:$0xff]
          %v2817 = vld [vmem:[%s229 + $0xa0] sm:$0xff]
          %v2818 = vld [vmem:[%s229 + $0xa8] sm:$0xff]
          %v2819 = vld [vmem:[%s229 + $0xb0] sm:$0xff]
          %v2820 = vld [vmem:[%s229 + $0xb8] sm:$0xff]
          %v2821 = vld [vmem:[%s229 + $0xc0] sm:$0xff]
          %v2822 = vld [vmem:[%s229 + $0xc8] sm:$0xff]
          %v2823 = vld [vmem:[%s229 + $0xd0] sm:$0xff]
          %v2824 = vld [vmem:[%s229 + $0xd8] sm:$0xff]
          %v2825 = vld [vmem:[%s229 + $0xe0] sm:$0xff]
          %v2826 = vld [vmem:[%s229 + $0xe8] sm:$0xff]
          %v2827 = vld [vmem:[%s229 + $0xf0] sm:$0xff]
          %v2828 = vld [vmem:[%s229 + $0xf8] sm:$0xff]
          %v2830 = vperm.slane %v2793, 0
          %v2832 = vmul.f32 %v2797, %v2830
          %v2833 = vmul.f32 %v2798, %v2830
          %v2834 = vmul.f32 %v2799, %v2830
          %v2835 = vmul.f32 %v2800, %v2830
          %v2836 = vmul.f32 %v2801, %v2830
          %v2837 = vmul.f32 %v2802, %v2830
          %v2838 = vmul.f32 %v2803, %v2830
          %v2839 = vmul.f32 %v2804, %v2830
          %v2840 = vmul.f32 %v2805, %v2830
          %v2841 = vmul.f32 %v2806, %v2830
          %v2842 = vmul.f32 %v2807, %v2830
          %v2843 = vmul.f32 %v2808, %v2830
          %v2844 = vmul.f32 %v2809, %v2830
          %v2845 = vmul.f32 %v2810, %v2830
          %v2846 = vmul.f32 %v2811, %v2830
          %v2847 = vmul.f32 %v2812, %v2830
          %v2848 = vmul.f32 %v2813, %v2830
          %v2849 = vmul.f32 %v2814, %v2830
          %v2850 = vmul.f32 %v2815, %v2830
          %v2851 = vmul.f32 %v2816, %v2830
          %v2852 = vmul.f32 %v2817, %v2830
          %v2853 = vmul.f32 %v2818, %v2830
          %v2854 = vmul.f32 %v2819, %v2830
          %v2855 = vmul.f32 %v2820, %v2830
          %v2856 = vmul.f32 %v2821, %v2830
          %v2857 = vmul.f32 %v2822, %v2830
          %v2858 = vmul.f32 %v2823, %v2830
          %v2859 = vmul.f32 %v2824, %v2830
          %v2860 = vmul.f32 %v2825, %v2830
          %v2861 = vmul.f32 %v2826, %v2830
          %v2862 = vmul.f32 %v2827, %v2830
          %v2863 = vmul.f32 %v2828, %v2830
          %v2865 = vperm.slane %v2796, 0
          %v2867 = vadd.f32 %v2832, %v2865
          %v2868 = vadd.f32 %v2833, %v2865
          %v2869 = vadd.f32 %v2834, %v2865
          %v2870 = vadd.f32 %v2835, %v2865
          %v2871 = vadd.f32 %v2836, %v2865
          %v2872 = vadd.f32 %v2837, %v2865
          %v2873 = vadd.f32 %v2838, %v2865
          %v2874 = vadd.f32 %v2839, %v2865
          %v2875 = vadd.f32 %v2840, %v2865
          %v2876 = vadd.f32 %v2841, %v2865
          %v2877 = vadd.f32 %v2842, %v2865
          %v2878 = vadd.f32 %v2843, %v2865
          %v2879 = vadd.f32 %v2844, %v2865
          %v2880 = vadd.f32 %v2845, %v2865
          %v2881 = vadd.f32 %v2846, %v2865
          %v2882 = vadd.f32 %v2847, %v2865
          %v2883 = vadd.f32 %v2848, %v2865
          %v2884 = vadd.f32 %v2849, %v2865
          %v2885 = vadd.f32 %v2850, %v2865
          %v2886 = vadd.f32 %v2851, %v2865
          %v2887 = vadd.f32 %v2852, %v2865
          %v2888 = vadd.f32 %v2853, %v2865
          %v2889 = vadd.f32 %v2854, %v2865
          %v2890 = vadd.f32 %v2855, %v2865
          %v2891 = vadd.f32 %v2856, %v2865
          %v2892 = vadd.f32 %v2857, %v2865
          %v2893 = vadd.f32 %v2858, %v2865
          %v2894 = vadd.f32 %v2859, %v2865
          %v2895 = vadd.f32 %v2860, %v2865
          %v2896 = vadd.f32 %v2861, %v2865
          %v2897 = vadd.f32 %v2862, %v2865
          %v2898 = vadd.f32 %v2863, %v2865
          %v2899 = vmax.f32 %v2867, 0.0
          %v2900 = vmax.f32 %v2868, 0.0
          %v2901 = vmax.f32 %v2869, 0.0
          %v2902 = vmax.f32 %v2870, 0.0
          %v2903 = vmax.f32 %v2871, 0.0
          %v2904 = vmax.f32 %v2872, 0.0
          %v2905 = vmax.f32 %v2873, 0.0
          %v2906 = vmax.f32 %v2874, 0.0
          %v2907 = vmax.f32 %v2875, 0.0
          %v2908 = vmax.f32 %v2876, 0.0
          %v2909 = vmax.f32 %v2877, 0.0
          %v2910 = vmax.f32 %v2878, 0.0
          %v2911 = vmax.f32 %v2879, 0.0
          %v2912 = vmax.f32 %v2880, 0.0
          %v2913 = vmax.f32 %v2881, 0.0
          %v2914 = vmax.f32 %v2882, 0.0
          %v2915 = vmax.f32 %v2883, 0.0
          %v2916 = vmax.f32 %v2884, 0.0
          %v2917 = vmax.f32 %v2885, 0.0
          %v2918 = vmax.f32 %v2886, 0.0
          %v2919 = vmax.f32 %v2887, 0.0
          %v2920 = vmax.f32 %v2888, 0.0
          %v2921 = vmax.f32 %v2889, 0.0
          %v2922 = vmax.f32 %v2890, 0.0
          %v2923 = vmax.f32 %v2891, 0.0
          %v2924 = vmax.f32 %v2892, 0.0
          %v2925 = vmax.f32 %v2893, 0.0
          %v2926 = vmax.f32 %v2894, 0.0
          %v2927 = vmax.f32 %v2895, 0.0
          %v2928 = vmax.f32 %v2896, 0.0
          %v2929 = vmax.f32 %v2897, 0.0
          %v2930 = vmax.f32 %v2898, 0.0
          %2931 = vst [vmem:[%s229] sm:$0xff] %v2899
          %2932 = vst [vmem:[%s229 + $0x8] sm:$0xff] %v2900
          %2933 = vst [vmem:[%s229 + $0x10] sm:$0xff] %v2901
          %2934 = vst [vmem:[%s229 + $0x18] sm:$0xff] %v2902
          %2935 = vst [vmem:[%s229 + $0x20] sm:$0xff] %v2903
          %2936 = vst [vmem:[%s229 + $0x28] sm:$0xff] %v2904
          %2937 = vst [vmem:[%s229 + $0x30] sm:$0xff] %v2905
          %2938 = vst [vmem:[%s229 + $0x38] sm:$0xff] %v2906
          %2939 = vst [vmem:[%s229 + $0x40] sm:$0xff] %v2907
          %2940 = vst [vmem:[%s229 + $0x48] sm:$0xff] %v2908
          %2941 = vst [vmem:[%s229 + $0x50] sm:$0xff] %v2909
          %2942 = vst [vmem:[%s229 + $0x58] sm:$0xff] %v2910
          %2943 = vst [vmem:[%s229 + $0x60] sm:$0xff] %v2911
          %2944 = vst [vmem:[%s229 + $0x68] sm:$0xff] %v2912
          %2945 = vst [vmem:[%s229 + $0x70] sm:$0xff] %v2913
          %2946 = vst [vmem:[%s229 + $0x78] sm:$0xff] %v2914
          %2947 = vst [vmem:[%s229 + $0x80] sm:$0xff] %v2915
          %2948 = vst [vmem:[%s229 + $0x88] sm:$0xff] %v2916
          %2949 = vst [vmem:[%s229 + $0x90] sm:$0xff] %v2917
          %2950 = vst [vmem:[%s229 + $0x98] sm:$0xff] %v2918
          %2951 = vst [vmem:[%s229 + $0xa0] sm:$0xff] %v2919
          %2952 = vst [vmem:[%s229 + $0xa8] sm:$0xff] %v2920
          %2953 = vst [vmem:[%s229 + $0xb0] sm:$0xff] %v2921
          %2954 = vst [vmem:[%s229 + $0xb8] sm:$0xff] %v2922
          %2955 = vst [vmem:[%s229 + $0xc0] sm:$0xff] %v2923
          %2956 = vst [vmem:[%s229 + $0xc8] sm:$0xff] %v2924
          %2957 = vst [vmem:[%s229 + $0xd0] sm:$0xff] %v2925
          %2958 = vst [vmem:[%s229 + $0xd8] sm:$0xff] %v2926
          %2959 = vst [vmem:[%s229 + $0xe0] sm:$0xff] %v2927
          %2960 = vst [vmem:[%s229 + $0xe8] sm:$0xff] %v2928
          %2961 = vst [vmem:[%s229 + $0xf0] sm:$0xff] %v2929
          %2962 = vst [vmem:[%s229 + $0xf8] sm:$0xff] %v2930
        $region48: #{tpu_custom_call.1} parent=39 // pred_fallthru
          _
        %s2963 = sand.u32 %s149, 1
        %s2964 = scalar_lea.sflag [#allocation5], %s2963
        %s2965 = sand.u32 %s149, 1
        %s2966 = smul.addr %s2965, 256
        %s2967 = scalar_lea.vmem [#allocation4], %s2966
        // Predicated region
        $region49: #{tpu_custom_call.1} parent=39 // pred_check
          %p2968 = pneg %p159
        $region50: #{tpu_custom_call.1} parent=39 // pred_check_branch
          %2970 = sbr.rel (%p2968) target = $region52
        $region51: #{tpu_custom_call.1} parent=39 // pred_region
          %2972 = vsyncadd %s2964, 0
          %s2973 = smul.addr %s23, 32
          %s2974 = smul.addr %s2973, 8
          %s2975 = scalar_lea.hbm %s5, %s2974
          %s2976 = sshll.u32 %s2967, 4
          %s2977 = int_to_ptr.vmem [resolvable:$true] %s2976
          %s2978 = sshll.u32 %s2975, 4
          %s2979 = int_to_ptr.hbm [resolvable:$true] %s2978
          %2984 = dma.vmem_to_hbm [thread:$0]  %s2977, 4096, %s2979, %s2964, 128, 128, 8
        $region52: #{tpu_custom_call.1} parent=39 // pred_fallthru
          _
      $region40: #{tpu_custom_call.1} parent=5 // pred_fallthru
        _
      %p2985 = scmp.le.s32.totalorder 2, %s14
      // Predicated region
      $region53: #{tpu_custom_call.1} parent=5 // pred_check
        %p2986 = pneg %p2985
      $region54: #{tpu_custom_call.1} parent=5 // pred_check_branch
        %2988 = sbr.rel (%p2986) target = $region56
      $region55: #{tpu_custom_call.1} parent=5 // pred_region
        %s2989 = ssub.s32 %s14, 2
        // Predicated region
        $region57: #{tpu_custom_call.1} parent=55 // pred_check
          %p2990 = pneg %p165
        $region58: #{tpu_custom_call.1} parent=55 // pred_check_branch
          %2992 = sbr.rel (%p2990) target = $region60
        $region59: #{tpu_custom_call.1} parent=55 // pred_region
          %s2993 = sand.u32 %s150, 1
          %s2994 = scalar_lea.sflag [#allocation5], %s2993
          %s2995 = sand.u32 %s150, 1
          %s2996 = smul.addr %s2995, 256
          %s2997 = scalar_lea.vmem [#allocation4], %s2996
          %2999 = dma.done %s2994, 4096
        $region60: #{tpu_custom_call.1} parent=55 // pred_fallthru
          _
      $region56: #{tpu_custom_call.1} parent=5 // pred_fallthru
        _
    $region6: #{tpu_custom_call.1} parent=1 // loop_footer
      %s18 = sadd.s32 1, %s14
    $region7: #{tpu_custom_call.1} parent=1 // loop_footer_branch
      %13 = sbr.rel target = $region3
    $region8: #{tpu_custom_call.1} parent=1 // loop_exit
      _
    %3000 = vsyncpa [#allocation5], 1
    %s3001 = scalar_lea.sflag [#allocation5], 1
    %3002 = vsyncpa %s3001, 1

</llo_original>
